<compile_context>
chip_gen: v5e
topology: v5e:2x2
jax: 0.10.0
libtpu: 0.0.40
codegen_flags: <defaults>
</compile_context>

<pallas_src>
import jax
import jax.numpy as jnp
from jax.experimental import pallas as pl
from jax.experimental.pallas import tpu as pltpu

# ---- model dims (small, synthetic) -----------------------------------------
N, L, D = 2, 8, 32          # batch, seq len, transformer width
H = 4                       # attention heads
DH = D // H                 # head dim
HID = 4 * D                 # MLP hidden
P = 64                      # text projection dim
LAYERS = 2                  # transformer depth
NL = N * L
SCALE = 1.0 / (DH ** 0.5)


# ---- in-kernel helpers ------------------------------------------------------
def _layernorm(x, w, b, eps=1e-5):
    mu = jnp.mean(x, axis=-1, keepdims=True)
    var = jnp.mean((x - mu) ** 2, axis=-1, keepdims=True)
    return (x - mu) * jax.lax.rsqrt(var + eps) * w + b


# ---- fused kernel: add_pos -> LAYERS x block -> ln_final[EOT] @ proj --------
def clip_text_kernel(x_ref, pos_ref, mask_ref, sel_ref,
                     ln1w_ref, ln1b_ref, wqkv_ref, bqkv_ref, wo_ref, bo_ref,
                     ln2w_ref, ln2b_ref, w1_ref, b1_ref, w2_ref, b2_ref,
                     lnfw_ref, lnfb_ref, proj_ref, o_ref):
    # x lives in vregs / VMEM for the whole pass; (NL, D) f32.
    x = x_ref[...] + pos_ref[...]
    mask = mask_ref[...]                       # (NL, NL) additive bias, built once

    for l in range(LAYERS):                    # static unroll, weights VMEM-resident
        # ---- multi-head self-attention (pre-LN, block-causal mask) ----
        h = _layernorm(x, ln1w_ref[l], ln1b_ref[l])
        qkv = jnp.dot(h.astype(jnp.bfloat16), wqkv_ref[l],
                      preferred_element_type=jnp.float32) + bqkv_ref[l]
        q, k, v = qkv[:, :D], qkv[:, D:2 * D], qkv[:, 2 * D:]

        wo_l = wo_ref[l]                                   # (D, D) bf16
        acc = jnp.zeros((NL, D), jnp.float32)
        for hh in range(H):                                # static head loop, no concat
            qh = q[:, hh * DH:(hh + 1) * DH]
            kh = k[:, hh * DH:(hh + 1) * DH]
            vh = v[:, hh * DH:(hh + 1) * DH]
            # q @ k^T without an explicit transpose op
            s = jax.lax.dot_general(qh, kh, (((1,), (1,)), ((), ())),
                                    preferred_element_type=jnp.float32)
            s = s * SCALE + mask
            s = s - jnp.max(s, axis=-1, keepdims=True)
            p = jnp.exp(s)
            p = p / jnp.sum(p, axis=-1, keepdims=True)
            head = jnp.dot(p, vh, preferred_element_type=jnp.float32)   # (NL, DH)
            # fold output projection: concat(heads) @ Wo == sum_h head_h @ Wo[rows_h]
            acc = acc + jnp.dot(head.astype(jnp.bfloat16),
                                wo_l[hh * DH:(hh + 1) * DH, :],
                                preferred_element_type=jnp.float32)
        x = x + acc + bo_ref[l]

        # ---- MLP (pre-LN, QuickGELU as in CLIP) ----
        h2 = _layernorm(x, ln2w_ref[l], ln2b_ref[l])
        m = jnp.dot(h2.astype(jnp.bfloat16), w1_ref[l],
                    preferred_element_type=jnp.float32) + b1_ref[l]
        m = m * jax.nn.sigmoid(1.702 * m)                  # QuickGELU
        m = jnp.dot(m.astype(jnp.bfloat16), w2_ref[l],
                    preferred_element_type=jnp.float32) + b2_ref[l]
        x = x + m

    # ---- EOT gather (exact one-hot matmul) + ln_final + text_projection ----
    feats = jnp.dot(sel_ref[...], x, preferred_element_type=jnp.float32)   # (N, D)
    feats = _layernorm(feats, lnfw_ref[...], lnfb_ref[...])
    o_ref[...] = jnp.dot(feats.astype(jnp.bfloat16), proj_ref[...],
                         preferred_element_type=jnp.float32)               # (N, P)


# ---- wrapper -----------------------------------------------------------------
_STACKED_NAMES = ("ln1w", "ln1b", "wqkv", "bqkv", "wo", "bo",
                  "ln2w", "ln2b", "w1", "b1", "w2", "b2")


def text_encoder(params, prompts, tokenized_prompts):
    # Cheap integer / constant glue done once in JAX (not hot-path compute).
    x = prompts.reshape(NL, D)
    pos = jnp.tile(params["pos"], (N, 1))                          # (NL, D)

    # Block-diagonal causal additive mask: causal within a sequence, no
    # cross-batch attention; large-finite negative instead of -inf.
    r = jnp.arange(NL)
    same_seq = (r[:, None] // L) == (r[None, :] // L)
    causal = r[None, :] <= r[:, None]
    mask = jnp.where(same_seq & causal, 0.0, -1e9).astype(jnp.float32)

    # EOT selection: CLIP's EOT token has the maximum token id, so argmax over
    # ids picks its position (same assumption as the PyTorch reference).
    eot = jnp.argmax(tokenized_prompts, axis=-1)
    sel = jax.nn.one_hot(jnp.arange(N) * L + eot, NL, dtype=jnp.float32)   # (N, NL)

    args = [x, pos, mask, sel]
    args += [params[name] for name in _STACKED_NAMES]
    args += [params["lnfw"], params["lnfb"], params["proj"]]

    # Single pallas_call, no grid: every operand is a whole-array VMEM block.
    return pl.pallas_call(
        clip_text_kernel,
        out_shape=jax.ShapeDtypeStruct((N, P), jnp.float32),
    )(*args)


# ---- deterministic synthetic parameters --------------------------------------
def init_params(key):
    ks = iter(jax.random.split(key, 6))

    def nrm(shape, dtype=jnp.float32, scale=0.02):
        return (scale * jax.random.normal(next(ks), shape)).astype(dtype)

    bf16 = jnp.bfloat16
    return {
        "pos": nrm((L, D)),
        # per-layer weights stacked on a leading LAYERS axis
        "ln1w": jnp.ones((LAYERS, 1, D), jnp.float32),
        "ln1b": jnp.zeros((LAYERS, 1, D), jnp.float32),
        "wqkv": nrm((LAYERS, D, 3 * D), dtype=bf16),
        "bqkv": jnp.zeros((LAYERS, 1, 3 * D), jnp.float32),
        "wo": nrm((LAYERS, D, D), dtype=bf16),
        "bo": jnp.zeros((LAYERS, 1, D), jnp.float32),
        "ln2w": jnp.ones((LAYERS, 1, D), jnp.float32),
        "ln2b": jnp.zeros((LAYERS, 1, D), jnp.float32),
        "w1": nrm((LAYERS, D, HID), dtype=bf16),
        "b1": jnp.zeros((LAYERS, 1, HID), jnp.float32),
        "w2": nrm((LAYERS, HID, D), dtype=bf16),
        "b2": jnp.zeros((LAYERS, 1, D), jnp.float32),
        "lnfw": jnp.ones((1, D), jnp.float32),
        "lnfb": jnp.zeros((1, D), jnp.float32),
        "proj": nrm((D, P), dtype=bf16),
    }


if __name__ == "__main__":
    key = jax.random.PRNGKey(0)
    kp, kx, kt = jax.random.split(key, 3)

    params = init_params(kp)
    prompts = jax.random.normal(kx, (N, L, D), dtype=jnp.float32)

    # synthetic token ids; place a large "EOT" id at a known position per row
    tokenized = jax.random.randint(kt, (N, L), 1, 100)
    eot_pos = jnp.array([5, 7], dtype=jnp.int32)
    tokenized = tokenized.at[jnp.arange(N), eot_pos].set(49407)

    out = text_encoder(params, prompts, tokenized)
    jax.block_until_ready(out)
    assert out.shape == (N, P) and out.dtype == jnp.float32
    print("KERNEL_OK")
</pallas_src>

<mosaic_0001>
module attributes {stable_mosaic.version = 11 : i64} {
  func.func @clip_text_kernel(%arg0: memref<16x32xf32, #tpu.memory_space<vmem>>, %arg1: memref<16x32xf32, #tpu.memory_space<vmem>>, %arg2: memref<16x16xf32, #tpu.memory_space<vmem>>, %arg3: memref<2x16xf32, #tpu.memory_space<vmem>>, %arg4: memref<2x1x32xf32, #tpu.memory_space<vmem>>, %arg5: memref<2x1x32xf32, #tpu.memory_space<vmem>>, %arg6: memref<2x32x96xbf16, #tpu.memory_space<vmem>>, %arg7: memref<2x1x96xf32, #tpu.memory_space<vmem>>, %arg8: memref<2x32x32xbf16, #tpu.memory_space<vmem>>, %arg9: memref<2x1x32xf32, #tpu.memory_space<vmem>>, %arg10: memref<2x1x32xf32, #tpu.memory_space<vmem>>, %arg11: memref<2x1x32xf32, #tpu.memory_space<vmem>>, %arg12: memref<2x32x128xbf16, #tpu.memory_space<vmem>>, %arg13: memref<2x1x128xf32, #tpu.memory_space<vmem>>, %arg14: memref<2x128x32xbf16, #tpu.memory_space<vmem>>, %arg15: memref<2x1x32xf32, #tpu.memory_space<vmem>>, %arg16: memref<1x32xf32, #tpu.memory_space<vmem>>, %arg17: memref<1x32xf32, #tpu.memory_space<vmem>>, %arg18: memref<32x64xbf16, #tpu.memory_space<vmem>>, %arg19: memref<2x64xf32, #tpu.memory_space<vmem>>) attributes {dimension_semantics = [], scalar_prefetch = 0 : i64, scratch_operands = 0 : i64, tpu.core_type = #tpu.core_type<tc>} {
    %c0 = arith.constant 0 : index
    %c0_0 = arith.constant 0 : index
    %0 = vector.load %arg0[%c0, %c0_0] : memref<16x32xf32, #tpu.memory_space<vmem>>, vector<16x32xf32>
    %c0_1 = arith.constant 0 : index
    %c0_2 = arith.constant 0 : index
    %1 = vector.load %arg1[%c0_1, %c0_2] : memref<16x32xf32, #tpu.memory_space<vmem>>, vector<16x32xf32>
    %2 = arith.addf %0, %1 : vector<16x32xf32>
    %c0_3 = arith.constant 0 : index
    %c0_4 = arith.constant 0 : index
    %3 = vector.load %arg2[%c0_3, %c0_4] : memref<16x16xf32, #tpu.memory_space<vmem>>, vector<16x16xf32>
    %c0_5 = arith.constant 0 : index
    %c0_6 = arith.constant 0 : index
    %c0_7 = arith.constant 0 : index
    %4 = vector.load %arg4[%c0_5, %c0_6, %c0_7] : memref<2x1x32xf32, #tpu.memory_space<vmem>>, vector<1x1x32xf32>
    %5 = vector.shape_cast %4 : vector<1x1x32xf32> to vector<1x32xf32>
    %c0_8 = arith.constant 0 : index
    %c0_9 = arith.constant 0 : index
    %c0_10 = arith.constant 0 : index
    %6 = vector.load %arg5[%c0_8, %c0_9, %c0_10] : memref<2x1x32xf32, #tpu.memory_space<vmem>>, vector<1x1x32xf32>
    %7 = vector.shape_cast %6 : vector<1x1x32xf32> to vector<1x32xf32>
    %cst = arith.constant dense<0.000000e+00> : vector<16xf32>
    %8 = vector.multi_reduction <add>, %2, %cst [1] : vector<16x32xf32> to vector<16xf32>
    %9 = vector.shape_cast %8 : vector<16xf32> to vector<16x1xf32>
    %cst_11 = arith.constant 3.200000e+01 : f32
    %10 = vector.broadcast %cst_11 : f32 to vector<16x1xf32>
    %11 = arith.divf %9, %10 : vector<16x1xf32>
    %12 = vector.broadcast %11 : vector<16x1xf32> to vector<16x32xf32>
    %13 = arith.subf %2, %12 : vector<16x32xf32>
    %14 = arith.mulf %13, %13 : vector<16x32xf32>
    %cst_12 = arith.constant dense<0.000000e+00> : vector<16xf32>
    %15 = vector.multi_reduction <add>, %14, %cst_12 [1] : vector<16x32xf32> to vector<16xf32>
    %16 = vector.shape_cast %15 : vector<16xf32> to vector<16x1xf32>
    %cst_13 = arith.constant 3.200000e+01 : f32
    %17 = vector.broadcast %cst_13 : f32 to vector<16x1xf32>
    %18 = arith.divf %16, %17 : vector<16x1xf32>
    %19 = vector.broadcast %11 : vector<16x1xf32> to vector<16x32xf32>
    %20 = arith.subf %2, %19 : vector<16x32xf32>
    %cst_14 = arith.constant 9.99999974E-6 : f32
    %21 = vector.broadcast %cst_14 : f32 to vector<16x1xf32>
    %22 = arith.addf %18, %21 : vector<16x1xf32>
    %23 = math.rsqrt %22 : vector<16x1xf32>
    %24 = vector.broadcast %23 : vector<16x1xf32> to vector<16x32xf32>
    %25 = arith.mulf %20, %24 : vector<16x32xf32>
    %26 = vector.broadcast %5 : vector<1x32xf32> to vector<16x32xf32>
    %27 = arith.mulf %25, %26 : vector<16x32xf32>
    %28 = vector.broadcast %7 : vector<1x32xf32> to vector<16x32xf32>
    %29 = arith.addf %27, %28 : vector<16x32xf32>
    %30 = arith.truncf %29 : vector<16x32xf32> to vector<16x32xbf16>
    %c0_15 = arith.constant 0 : index
    %c0_16 = arith.constant 0 : index
    %c0_17 = arith.constant 0 : index
    %31 = vector.load %arg6[%c0_15, %c0_16, %c0_17] : memref<2x32x96xbf16, #tpu.memory_space<vmem>>, vector<1x32x96xbf16>
    %32 = vector.shape_cast %31 : vector<1x32x96xbf16> to vector<32x96xbf16>
    %cst_18 = arith.constant dense<0.000000e+00> : vector<16x96xf32>
    %33 = tpu.matmul %30, %32, %cst_18 {dimension_numbers = #tpu.dot_dimension_numbers<[1], [0], [0], [1], [0, 0, 1, 1], [], []>} : vector<16x32xbf16>, vector<32x96xbf16>, vector<16x96xf32> -> vector<16x96xf32>
    %c0_19 = arith.constant 0 : index
    %c0_20 = arith.constant 0 : index
    %c0_21 = arith.constant 0 : index
    %34 = vector.load %arg7[%c0_19, %c0_20, %c0_21] : memref<2x1x96xf32, #tpu.memory_space<vmem>>, vector<1x1x96xf32>
    %35 = vector.shape_cast %34 : vector<1x1x96xf32> to vector<1x96xf32>
    %36 = vector.broadcast %35 : vector<1x96xf32> to vector<16x96xf32>
    %37 = arith.addf %33, %36 : vector<16x96xf32>
    %38 = vector.extract_strided_slice %37 {offsets = [0, 0], sizes = [16, 32], strides = [1, 1]} : vector<16x96xf32> to vector<16x32xf32>
    %39 = vector.extract_strided_slice %37 {offsets = [0, 32], sizes = [16, 32], strides = [1, 1]} : vector<16x96xf32> to vector<16x32xf32>
    %40 = vector.extract_strided_slice %37 {offsets = [0, 64], sizes = [16, 32], strides = [1, 1]} : vector<16x96xf32> to vector<16x32xf32>
    %c0_22 = arith.constant 0 : index
    %c0_23 = arith.constant 0 : index
    %c0_24 = arith.constant 0 : index
    %41 = vector.load %arg8[%c0_22, %c0_23, %c0_24] : memref<2x32x32xbf16, #tpu.memory_space<vmem>>, vector<1x32x32xbf16>
    %42 = vector.shape_cast %41 : vector<1x32x32xbf16> to vector<32x32xbf16>
    %cst_25 = arith.constant 0.000000e+00 : f32
    %43 = vector.broadcast %cst_25 : f32 to vector<16x32xf32>
    %44 = vector.extract_strided_slice %38 {offsets = [0, 0], sizes = [16, 8], strides = [1, 1]} : vector<16x32xf32> to vector<16x8xf32>
    %45 = vector.extract_strided_slice %39 {offsets = [0, 0], sizes = [16, 8], strides = [1, 1]} : vector<16x32xf32> to vector<16x8xf32>
    %46 = vector.extract_strided_slice %40 {offsets = [0, 0], sizes = [16, 8], strides = [1, 1]} : vector<16x32xf32> to vector<16x8xf32>
    %cst_26 = arith.constant dense<0.000000e+00> : vector<16x16xf32>
    %47 = tpu.matmul %44, %45, %cst_26 {dimension_numbers = #tpu.dot_dimension_numbers<[1], [1], [0], [0], [0, 0, 1, 0], [], []>} : vector<16x8xf32>, vector<16x8xf32>, vector<16x16xf32> -> vector<16x16xf32>
    %cst_27 = arith.constant 0.353553385 : f32
    %48 = vector.broadcast %cst_27 : f32 to vector<16x16xf32>
    %49 = arith.mulf %47, %48 : vector<16x16xf32>
    %50 = arith.addf %49, %3 : vector<16x16xf32>
    %cst_28 = arith.constant dense<0xFF800000> : vector<16xf32>
    %51 = vector.multi_reduction <maximumf>, %50, %cst_28 [1] : vector<16x16xf32> to vector<16xf32>
    %52 = vector.shape_cast %51 : vector<16xf32> to vector<16x1xf32>
    %53 = vector.broadcast %52 : vector<16x1xf32> to vector<16x16xf32>
    %54 = arith.subf %50, %53 : vector<16x16xf32>
    %55 = math.exp %54 : vector<16x16xf32>
    %cst_29 = arith.constant dense<0.000000e+00> : vector<16xf32>
    %56 = vector.multi_reduction <add>, %55, %cst_29 [1] : vector<16x16xf32> to vector<16xf32>
    %57 = vector.shape_cast %56 : vector<16xf32> to vector<16x1xf32>
    %58 = vector.broadcast %57 : vector<16x1xf32> to vector<16x16xf32>
    %59 = arith.divf %55, %58 : vector<16x16xf32>
    %cst_30 = arith.constant dense<0.000000e+00> : vector<16x8xf32>
    %60 = tpu.matmul %59, %46, %cst_30 {dimension_numbers = #tpu.dot_dimension_numbers<[1], [0], [0], [1], [0, 0, 1, 1], [], []>} : vector<16x16xf32>, vector<16x8xf32>, vector<16x8xf32> -> vector<16x8xf32>
    %61 = arith.truncf %60 : vector<16x8xf32> to vector<16x8xbf16>
    %62 = vector.extract_strided_slice %42 {offsets = [0, 0], sizes = [8, 32], strides = [1, 1]} : vector<32x32xbf16> to vector<8x32xbf16>
    %cst_31 = arith.constant dense<0.000000e+00> : vector<16x32xf32>
    %63 = tpu.matmul %61, %62, %cst_31 {dimension_numbers = #tpu.dot_dimension_numbers<[1], [0], [0], [1], [0, 0, 1, 1], [], []>} : vector<16x8xbf16>, vector<8x32xbf16>, vector<16x32xf32> -> vector<16x32xf32>
    %64 = arith.addf %43, %63 : vector<16x32xf32>
    %65 = vector.extract_strided_slice %38 {offsets = [0, 8], sizes = [16, 8], strides = [1, 1]} : vector<16x32xf32> to vector<16x8xf32>
    %66 = vector.extract_strided_slice %39 {offsets = [0, 8], sizes = [16, 8], strides = [1, 1]} : vector<16x32xf32> to vector<16x8xf32>
    %67 = vector.extract_strided_slice %40 {offsets = [0, 8], sizes = [16, 8], strides = [1, 1]} : vector<16x32xf32> to vector<16x8xf32>
    %cst_32 = arith.constant dense<0.000000e+00> : vector<16x16xf32>
    %68 = tpu.matmul %65, %66, %cst_32 {dimension_numbers = #tpu.dot_dimension_numbers<[1], [1], [0], [0], [0, 0, 1, 0], [], []>} : vector<16x8xf32>, vector<16x8xf32>, vector<16x16xf32> -> vector<16x16xf32>
    %cst_33 = arith.constant 0.353553385 : f32
    %69 = vector.broadcast %cst_33 : f32 to vector<16x16xf32>
    %70 = arith.mulf %68, %69 : vector<16x16xf32>
    %71 = arith.addf %70, %3 : vector<16x16xf32>
    %cst_34 = arith.constant dense<0xFF800000> : vector<16xf32>
    %72 = vector.multi_reduction <maximumf>, %71, %cst_34 [1] : vector<16x16xf32> to vector<16xf32>
    %73 = vector.shape_cast %72 : vector<16xf32> to vector<16x1xf32>
    %74 = vector.broadcast %73 : vector<16x1xf32> to vector<16x16xf32>
    %75 = arith.subf %71, %74 : vector<16x16xf32>
    %76 = math.exp %75 : vector<16x16xf32>
    %cst_35 = arith.constant dense<0.000000e+00> : vector<16xf32>
    %77 = vector.multi_reduction <add>, %76, %cst_35 [1] : vector<16x16xf32> to vector<16xf32>
    %78 = vector.shape_cast %77 : vector<16xf32> to vector<16x1xf32>
    %79 = vector.broadcast %78 : vector<16x1xf32> to vector<16x16xf32>
    %80 = arith.divf %76, %79 : vector<16x16xf32>
    %cst_36 = arith.constant dense<0.000000e+00> : vector<16x8xf32>
    %81 = tpu.matmul %80, %67, %cst_36 {dimension_numbers = #tpu.dot_dimension_numbers<[1], [0], [0], [1], [0, 0, 1, 1], [], []>} : vector<16x16xf32>, vector<16x8xf32>, vector<16x8xf32> -> vector<16x8xf32>
    %82 = arith.truncf %81 : vector<16x8xf32> to vector<16x8xbf16>
    %83 = vector.extract_strided_slice %42 {offsets = [8, 0], sizes = [8, 32], strides = [1, 1]} : vector<32x32xbf16> to vector<8x32xbf16>
    %cst_37 = arith.constant dense<0.000000e+00> : vector<16x32xf32>
    %84 = tpu.matmul %82, %83, %cst_37 {dimension_numbers = #tpu.dot_dimension_numbers<[1], [0], [0], [1], [0, 0, 1, 1], [], []>} : vector<16x8xbf16>, vector<8x32xbf16>, vector<16x32xf32> -> vector<16x32xf32>
    %85 = arith.addf %64, %84 : vector<16x32xf32>
    %86 = vector.extract_strided_slice %38 {offsets = [0, 16], sizes = [16, 8], strides = [1, 1]} : vector<16x32xf32> to vector<16x8xf32>
    %87 = vector.extract_strided_slice %39 {offsets = [0, 16], sizes = [16, 8], strides = [1, 1]} : vector<16x32xf32> to vector<16x8xf32>
    %88 = vector.extract_strided_slice %40 {offsets = [0, 16], sizes = [16, 8], strides = [1, 1]} : vector<16x32xf32> to vector<16x8xf32>
    %cst_38 = arith.constant dense<0.000000e+00> : vector<16x16xf32>
    %89 = tpu.matmul %86, %87, %cst_38 {dimension_numbers = #tpu.dot_dimension_numbers<[1], [1], [0], [0], [0, 0, 1, 0], [], []>} : vector<16x8xf32>, vector<16x8xf32>, vector<16x16xf32> -> vector<16x16xf32>
    %cst_39 = arith.constant 0.353553385 : f32
    %90 = vector.broadcast %cst_39 : f32 to vector<16x16xf32>
    %91 = arith.mulf %89, %90 : vector<16x16xf32>
    %92 = arith.addf %91, %3 : vector<16x16xf32>
    %cst_40 = arith.constant dense<0xFF800000> : vector<16xf32>
    %93 = vector.multi_reduction <maximumf>, %92, %cst_40 [1] : vector<16x16xf32> to vector<16xf32>
    %94 = vector.shape_cast %93 : vector<16xf32> to vector<16x1xf32>
    %95 = vector.broadcast %94 : vector<16x1xf32> to vector<16x16xf32>
    %96 = arith.subf %92, %95 : vector<16x16xf32>
    %97 = math.exp %96 : vector<16x16xf32>
    %cst_41 = arith.constant dense<0.000000e+00> : vector<16xf32>
    %98 = vector.multi_reduction <add>, %97, %cst_41 [1] : vector<16x16xf32> to vector<16xf32>
    %99 = vector.shape_cast %98 : vector<16xf32> to vector<16x1xf32>
    %100 = vector.broadcast %99 : vector<16x1xf32> to vector<16x16xf32>
    %101 = arith.divf %97, %100 : vector<16x16xf32>
    %cst_42 = arith.constant dense<0.000000e+00> : vector<16x8xf32>
    %102 = tpu.matmul %101, %88, %cst_42 {dimension_numbers = #tpu.dot_dimension_numbers<[1], [0], [0], [1], [0, 0, 1, 1], [], []>} : vector<16x16xf32>, vector<16x8xf32>, vector<16x8xf32> -> vector<16x8xf32>
    %103 = arith.truncf %102 : vector<16x8xf32> to vector<16x8xbf16>
    %104 = vector.extract_strided_slice %42 {offsets = [16, 0], sizes = [8, 32], strides = [1, 1]} : vector<32x32xbf16> to vector<8x32xbf16>
    %cst_43 = arith.constant dense<0.000000e+00> : vector<16x32xf32>
    %105 = tpu.matmul %103, %104, %cst_43 {dimension_numbers = #tpu.dot_dimension_numbers<[1], [0], [0], [1], [0, 0, 1, 1], [], []>} : vector<16x8xbf16>, vector<8x32xbf16>, vector<16x32xf32> -> vector<16x32xf32>
    %106 = arith.addf %85, %105 : vector<16x32xf32>
    %107 = vector.extract_strided_slice %38 {offsets = [0, 24], sizes = [16, 8], strides = [1, 1]} : vector<16x32xf32> to vector<16x8xf32>
    %108 = vector.extract_strided_slice %39 {offsets = [0, 24], sizes = [16, 8], strides = [1, 1]} : vector<16x32xf32> to vector<16x8xf32>
    %109 = vector.extract_strided_slice %40 {offsets = [0, 24], sizes = [16, 8], strides = [1, 1]} : vector<16x32xf32> to vector<16x8xf32>
    %cst_44 = arith.constant dense<0.000000e+00> : vector<16x16xf32>
    %110 = tpu.matmul %107, %108, %cst_44 {dimension_numbers = #tpu.dot_dimension_numbers<[1], [1], [0], [0], [0, 0, 1, 0], [], []>} : vector<16x8xf32>, vector<16x8xf32>, vector<16x16xf32> -> vector<16x16xf32>
    %cst_45 = arith.constant 0.353553385 : f32
    %111 = vector.broadcast %cst_45 : f32 to vector<16x16xf32>
    %112 = arith.mulf %110, %111 : vector<16x16xf32>
    %113 = arith.addf %112, %3 : vector<16x16xf32>
    %cst_46 = arith.constant dense<0xFF800000> : vector<16xf32>
    %114 = vector.multi_reduction <maximumf>, %113, %cst_46 [1] : vector<16x16xf32> to vector<16xf32>
    %115 = vector.shape_cast %114 : vector<16xf32> to vector<16x1xf32>
    %116 = vector.broadcast %115 : vector<16x1xf32> to vector<16x16xf32>
    %117 = arith.subf %113, %116 : vector<16x16xf32>
    %118 = math.exp %117 : vector<16x16xf32>
    %cst_47 = arith.constant dense<0.000000e+00> : vector<16xf32>
    %119 = vector.multi_reduction <add>, %118, %cst_47 [1] : vector<16x16xf32> to vector<16xf32>
    %120 = vector.shape_cast %119 : vector<16xf32> to vector<16x1xf32>
    %121 = vector.broadcast %120 : vector<16x1xf32> to vector<16x16xf32>
    %122 = arith.divf %118, %121 : vector<16x16xf32>
    %cst_48 = arith.constant dense<0.000000e+00> : vector<16x8xf32>
    %123 = tpu.matmul %122, %109, %cst_48 {dimension_numbers = #tpu.dot_dimension_numbers<[1], [0], [0], [1], [0, 0, 1, 1], [], []>} : vector<16x16xf32>, vector<16x8xf32>, vector<16x8xf32> -> vector<16x8xf32>
    %124 = arith.truncf %123 : vector<16x8xf32> to vector<16x8xbf16>
    %125 = vector.extract_strided_slice %42 {offsets = [24, 0], sizes = [8, 32], strides = [1, 1]} : vector<32x32xbf16> to vector<8x32xbf16>
    %cst_49 = arith.constant dense<0.000000e+00> : vector<16x32xf32>
    %126 = tpu.matmul %124, %125, %cst_49 {dimension_numbers = #tpu.dot_dimension_numbers<[1], [0], [0], [1], [0, 0, 1, 1], [], []>} : vector<16x8xbf16>, vector<8x32xbf16>, vector<16x32xf32> -> vector<16x32xf32>
    %127 = arith.addf %106, %126 : vector<16x32xf32>
    %128 = arith.addf %2, %127 : vector<16x32xf32>
    %c0_50 = arith.constant 0 : index
    %c0_51 = arith.constant 0 : index
    %c0_52 = arith.constant 0 : index
    %129 = vector.load %arg9[%c0_50, %c0_51, %c0_52] : memref<2x1x32xf32, #tpu.memory_space<vmem>>, vector<1x1x32xf32>
    %130 = vector.shape_cast %129 : vector<1x1x32xf32> to vector<1x32xf32>
    %131 = vector.broadcast %130 : vector<1x32xf32> to vector<16x32xf32>
    %132 = arith.addf %128, %131 : vector<16x32xf32>
    %c0_53 = arith.constant 0 : index
    %c0_54 = arith.constant 0 : index
    %c0_55 = arith.constant 0 : index
    %133 = vector.load %arg10[%c0_53, %c0_54, %c0_55] : memref<2x1x32xf32, #tpu.memory_space<vmem>>, vector<1x1x32xf32>
    %134 = vector.shape_cast %133 : vector<1x1x32xf32> to vector<1x32xf32>
    %c0_56 = arith.constant 0 : index
    %c0_57 = arith.constant 0 : index
    %c0_58 = arith.constant 0 : index
    %135 = vector.load %arg11[%c0_56, %c0_57, %c0_58] : memref<2x1x32xf32, #tpu.memory_space<vmem>>, vector<1x1x32xf32>
    %136 = vector.shape_cast %135 : vector<1x1x32xf32> to vector<1x32xf32>
    %cst_59 = arith.constant dense<0.000000e+00> : vector<16xf32>
    %137 = vector.multi_reduction <add>, %132, %cst_59 [1] : vector<16x32xf32> to vector<16xf32>
    %138 = vector.shape_cast %137 : vector<16xf32> to vector<16x1xf32>
    %cst_60 = arith.constant 3.200000e+01 : f32
    %139 = vector.broadcast %cst_60 : f32 to vector<16x1xf32>
    %140 = arith.divf %138, %139 : vector<16x1xf32>
    %141 = vector.broadcast %140 : vector<16x1xf32> to vector<16x32xf32>
    %142 = arith.subf %132, %141 : vector<16x32xf32>
    %143 = arith.mulf %142, %142 : vector<16x32xf32>
    %cst_61 = arith.constant dense<0.000000e+00> : vector<16xf32>
    %144 = vector.multi_reduction <add>, %143, %cst_61 [1] : vector<16x32xf32> to vector<16xf32>
    %145 = vector.shape_cast %144 : vector<16xf32> to vector<16x1xf32>
    %cst_62 = arith.constant 3.200000e+01 : f32
    %146 = vector.broadcast %cst_62 : f32 to vector<16x1xf32>
    %147 = arith.divf %145, %146 : vector<16x1xf32>
    %148 = vector.broadcast %140 : vector<16x1xf32> to vector<16x32xf32>
    %149 = arith.subf %132, %148 : vector<16x32xf32>
    %cst_63 = arith.constant 9.99999974E-6 : f32
    %150 = vector.broadcast %cst_63 : f32 to vector<16x1xf32>
    %151 = arith.addf %147, %150 : vector<16x1xf32>
    %152 = math.rsqrt %151 : vector<16x1xf32>
    %153 = vector.broadcast %152 : vector<16x1xf32> to vector<16x32xf32>
    %154 = arith.mulf %149, %153 : vector<16x32xf32>
    %155 = vector.broadcast %134 : vector<1x32xf32> to vector<16x32xf32>
    %156 = arith.mulf %154, %155 : vector<16x32xf32>
    %157 = vector.broadcast %136 : vector<1x32xf32> to vector<16x32xf32>
    %158 = arith.addf %156, %157 : vector<16x32xf32>
    %159 = arith.truncf %158 : vector<16x32xf32> to vector<16x32xbf16>
    %c0_64 = arith.constant 0 : index
    %c0_65 = arith.constant 0 : index
    %c0_66 = arith.constant 0 : index
    %160 = vector.load %arg12[%c0_64, %c0_65, %c0_66] : memref<2x32x128xbf16, #tpu.memory_space<vmem>>, vector<1x32x128xbf16>
    %161 = vector.shape_cast %160 : vector<1x32x128xbf16> to vector<32x128xbf16>
    %cst_67 = arith.constant dense<0.000000e+00> : vector<16x128xf32>
    %162 = tpu.matmul %159, %161, %cst_67 {dimension_numbers = #tpu.dot_dimension_numbers<[1], [0], [0], [1], [0, 0, 1, 1], [], []>} : vector<16x32xbf16>, vector<32x128xbf16>, vector<16x128xf32> -> vector<16x128xf32>
    %c0_68 = arith.constant 0 : index
    %c0_69 = arith.constant 0 : index
    %c0_70 = arith.constant 0 : index
    %163 = vector.load %arg13[%c0_68, %c0_69, %c0_70] : memref<2x1x128xf32, #tpu.memory_space<vmem>>, vector<1x1x128xf32>
    %164 = vector.shape_cast %163 : vector<1x1x128xf32> to vector<1x128xf32>
    %165 = vector.broadcast %164 : vector<1x128xf32> to vector<16x128xf32>
    %166 = arith.addf %162, %165 : vector<16x128xf32>
    %cst_71 = arith.constant 1.702000e+00 : f32
    %167 = vector.broadcast %cst_71 : f32 to vector<16x128xf32>
    %168 = arith.mulf %167, %166 : vector<16x128xf32>
    %169 = arith.negf %168 : vector<16x128xf32>
    %170 = math.exp %169 : vector<16x128xf32>
    %cst_72 = arith.constant 1.000000e+00 : f32
    %171 = vector.broadcast %cst_72 : f32 to vector<16x128xf32>
    %172 = arith.addf %171, %170 : vector<16x128xf32>
    %173 = arith.divf %171, %172 : vector<16x128xf32>
    %174 = arith.mulf %166, %173 : vector<16x128xf32>
    %175 = arith.truncf %174 : vector<16x128xf32> to vector<16x128xbf16>
    %c0_73 = arith.constant 0 : index
    %c0_74 = arith.constant 0 : index
    %c0_75 = arith.constant 0 : index
    %176 = vector.load %arg14[%c0_73, %c0_74, %c0_75] : memref<2x128x32xbf16, #tpu.memory_space<vmem>>, vector<1x128x32xbf16>
    %177 = vector.shape_cast %176 : vector<1x128x32xbf16> to vector<128x32xbf16>
    %cst_76 = arith.constant dense<0.000000e+00> : vector<16x32xf32>
    %178 = tpu.matmul %175, %177, %cst_76 {dimension_numbers = #tpu.dot_dimension_numbers<[1], [0], [0], [1], [0, 0, 1, 1], [], []>} : vector<16x128xbf16>, vector<128x32xbf16>, vector<16x32xf32> -> vector<16x32xf32>
    %c0_77 = arith.constant 0 : index
    %c0_78 = arith.constant 0 : index
    %c0_79 = arith.constant 0 : index
    %179 = vector.load %arg15[%c0_77, %c0_78, %c0_79] : memref<2x1x32xf32, #tpu.memory_space<vmem>>, vector<1x1x32xf32>
    %180 = vector.shape_cast %179 : vector<1x1x32xf32> to vector<1x32xf32>
    %181 = vector.broadcast %180 : vector<1x32xf32> to vector<16x32xf32>
    %182 = arith.addf %178, %181 : vector<16x32xf32>
    %183 = arith.addf %132, %182 : vector<16x32xf32>
    %c1 = arith.constant 1 : index
    %c0_80 = arith.constant 0 : index
    %c0_81 = arith.constant 0 : index
    %184 = vector.load %arg4[%c1, %c0_80, %c0_81] : memref<2x1x32xf32, #tpu.memory_space<vmem>>, vector<1x1x32xf32>
    %185 = vector.shape_cast %184 : vector<1x1x32xf32> to vector<1x32xf32>
    %c1_82 = arith.constant 1 : index
    %c0_83 = arith.constant 0 : index
    %c0_84 = arith.constant 0 : index
    %186 = vector.load %arg5[%c1_82, %c0_83, %c0_84] : memref<2x1x32xf32, #tpu.memory_space<vmem>>, vector<1x1x32xf32>
    %187 = vector.shape_cast %186 : vector<1x1x32xf32> to vector<1x32xf32>
    %cst_85 = arith.constant dense<0.000000e+00> : vector<16xf32>
    %188 = vector.multi_reduction <add>, %183, %cst_85 [1] : vector<16x32xf32> to vector<16xf32>
    %189 = vector.shape_cast %188 : vector<16xf32> to vector<16x1xf32>
    %cst_86 = arith.constant 3.200000e+01 : f32
    %190 = vector.broadcast %cst_86 : f32 to vector<16x1xf32>
    %191 = arith.divf %189, %190 : vector<16x1xf32>
    %192 = vector.broadcast %191 : vector<16x1xf32> to vector<16x32xf32>
    %193 = arith.subf %183, %192 : vector<16x32xf32>
    %194 = arith.mulf %193, %193 : vector<16x32xf32>
    %cst_87 = arith.constant dense<0.000000e+00> : vector<16xf32>
    %195 = vector.multi_reduction <add>, %194, %cst_87 [1] : vector<16x32xf32> to vector<16xf32>
    %196 = vector.shape_cast %195 : vector<16xf32> to vector<16x1xf32>
    %cst_88 = arith.constant 3.200000e+01 : f32
    %197 = vector.broadcast %cst_88 : f32 to vector<16x1xf32>
    %198 = arith.divf %196, %197 : vector<16x1xf32>
    %199 = vector.broadcast %191 : vector<16x1xf32> to vector<16x32xf32>
    %200 = arith.subf %183, %199 : vector<16x32xf32>
    %cst_89 = arith.constant 9.99999974E-6 : f32
    %201 = vector.broadcast %cst_89 : f32 to vector<16x1xf32>
    %202 = arith.addf %198, %201 : vector<16x1xf32>
    %203 = math.rsqrt %202 : vector<16x1xf32>
    %204 = vector.broadcast %203 : vector<16x1xf32> to vector<16x32xf32>
    %205 = arith.mulf %200, %204 : vector<16x32xf32>
    %206 = vector.broadcast %185 : vector<1x32xf32> to vector<16x32xf32>
    %207 = arith.mulf %205, %206 : vector<16x32xf32>
    %208 = vector.broadcast %187 : vector<1x32xf32> to vector<16x32xf32>
    %209 = arith.addf %207, %208 : vector<16x32xf32>
    %210 = arith.truncf %209 : vector<16x32xf32> to vector<16x32xbf16>
    %c1_90 = arith.constant 1 : index
    %c0_91 = arith.constant 0 : index
    %c0_92 = arith.constant 0 : index
    %211 = vector.load %arg6[%c1_90, %c0_91, %c0_92] : memref<2x32x96xbf16, #tpu.memory_space<vmem>>, vector<1x32x96xbf16>
    %212 = vector.shape_cast %211 : vector<1x32x96xbf16> to vector<32x96xbf16>
    %cst_93 = arith.constant dense<0.000000e+00> : vector<16x96xf32>
    %213 = tpu.matmul %210, %212, %cst_93 {dimension_numbers = #tpu.dot_dimension_numbers<[1], [0], [0], [1], [0, 0, 1, 1], [], []>} : vector<16x32xbf16>, vector<32x96xbf16>, vector<16x96xf32> -> vector<16x96xf32>
    %c1_94 = arith.constant 1 : index
    %c0_95 = arith.constant 0 : index
    %c0_96 = arith.constant 0 : index
    %214 = vector.load %arg7[%c1_94, %c0_95, %c0_96] : memref<2x1x96xf32, #tpu.memory_space<vmem>>, vector<1x1x96xf32>
    %215 = vector.shape_cast %214 : vector<1x1x96xf32> to vector<1x96xf32>
    %216 = vector.broadcast %215 : vector<1x96xf32> to vector<16x96xf32>
    %217 = arith.addf %213, %216 : vector<16x96xf32>
    %218 = vector.extract_strided_slice %217 {offsets = [0, 0], sizes = [16, 32], strides = [1, 1]} : vector<16x96xf32> to vector<16x32xf32>
    %219 = vector.extract_strided_slice %217 {offsets = [0, 32], sizes = [16, 32], strides = [1, 1]} : vector<16x96xf32> to vector<16x32xf32>
    %220 = vector.extract_strided_slice %217 {offsets = [0, 64], sizes = [16, 32], strides = [1, 1]} : vector<16x96xf32> to vector<16x32xf32>
    %c1_97 = arith.constant 1 : index
    %c0_98 = arith.constant 0 : index
    %c0_99 = arith.constant 0 : index
    %221 = vector.load %arg8[%c1_97, %c0_98, %c0_99] : memref<2x32x32xbf16, #tpu.memory_space<vmem>>, vector<1x32x32xbf16>
    %222 = vector.shape_cast %221 : vector<1x32x32xbf16> to vector<32x32xbf16>
    %cst_100 = arith.constant 0.000000e+00 : f32
    %223 = vector.broadcast %cst_100 : f32 to vector<16x32xf32>
    %224 = vector.extract_strided_slice %218 {offsets = [0, 0], sizes = [16, 8], strides = [1, 1]} : vector<16x32xf32> to vector<16x8xf32>
    %225 = vector.extract_strided_slice %219 {offsets = [0, 0], sizes = [16, 8], strides = [1, 1]} : vector<16x32xf32> to vector<16x8xf32>
    %226 = vector.extract_strided_slice %220 {offsets = [0, 0], sizes = [16, 8], strides = [1, 1]} : vector<16x32xf32> to vector<16x8xf32>
    %cst_101 = arith.constant dense<0.000000e+00> : vector<16x16xf32>
    %227 = tpu.matmul %224, %225, %cst_101 {dimension_numbers = #tpu.dot_dimension_numbers<[1], [1], [0], [0], [0, 0, 1, 0], [], []>} : vector<16x8xf32>, vector<16x8xf32>, vector<16x16xf32> -> vector<16x16xf32>
    %cst_102 = arith.constant 0.353553385 : f32
    %228 = vector.broadcast %cst_102 : f32 to vector<16x16xf32>
    %229 = arith.mulf %227, %228 : vector<16x16xf32>
    %230 = arith.addf %229, %3 : vector<16x16xf32>
    %cst_103 = arith.constant dense<0xFF800000> : vector<16xf32>
    %231 = vector.multi_reduction <maximumf>, %230, %cst_103 [1] : vector<16x16xf32> to vector<16xf32>
    %232 = vector.shape_cast %231 : vector<16xf32> to vector<16x1xf32>
    %233 = vector.broadcast %232 : vector<16x1xf32> to vector<16x16xf32>
    %234 = arith.subf %230, %233 : vector<16x16xf32>
    %235 = math.exp %234 : vector<16x16xf32>
    %cst_104 = arith.constant dense<0.000000e+00> : vector<16xf32>
    %236 = vector.multi_reduction <add>, %235, %cst_104 [1] : vector<16x16xf32> to vector<16xf32>
    %237 = vector.shape_cast %236 : vector<16xf32> to vector<16x1xf32>
    %238 = vector.broadcast %237 : vector<16x1xf32> to vector<16x16xf32>
    %239 = arith.divf %235, %238 : vector<16x16xf32>
    %cst_105 = arith.constant dense<0.000000e+00> : vector<16x8xf32>
    %240 = tpu.matmul %239, %226, %cst_105 {dimension_numbers = #tpu.dot_dimension_numbers<[1], [0], [0], [1], [0, 0, 1, 1], [], []>} : vector<16x16xf32>, vector<16x8xf32>, vector<16x8xf32> -> vector<16x8xf32>
    %241 = arith.truncf %240 : vector<16x8xf32> to vector<16x8xbf16>
    %242 = vector.extract_strided_slice %222 {offsets = [0, 0], sizes = [8, 32], strides = [1, 1]} : vector<32x32xbf16> to vector<8x32xbf16>
    %cst_106 = arith.constant dense<0.000000e+00> : vector<16x32xf32>
    %243 = tpu.matmul %241, %242, %cst_106 {dimension_numbers = #tpu.dot_dimension_numbers<[1], [0], [0], [1], [0, 0, 1, 1], [], []>} : vector<16x8xbf16>, vector<8x32xbf16>, vector<16x32xf32> -> vector<16x32xf32>
    %244 = arith.addf %223, %243 : vector<16x32xf32>
    %245 = vector.extract_strided_slice %218 {offsets = [0, 8], sizes = [16, 8], strides = [1, 1]} : vector<16x32xf32> to vector<16x8xf32>
    %246 = vector.extract_strided_slice %219 {offsets = [0, 8], sizes = [16, 8], strides = [1, 1]} : vector<16x32xf32> to vector<16x8xf32>
    %247 = vector.extract_strided_slice %220 {offsets = [0, 8], sizes = [16, 8], strides = [1, 1]} : vector<16x32xf32> to vector<16x8xf32>
    %cst_107 = arith.constant dense<0.000000e+00> : vector<16x16xf32>
    %248 = tpu.matmul %245, %246, %cst_107 {dimension_numbers = #tpu.dot_dimension_numbers<[1], [1], [0], [0], [0, 0, 1, 0], [], []>} : vector<16x8xf32>, vector<16x8xf32>, vector<16x16xf32> -> vector<16x16xf32>
    %cst_108 = arith.constant 0.353553385 : f32
    %249 = vector.broadcast %cst_108 : f32 to vector<16x16xf32>
    %250 = arith.mulf %248, %249 : vector<16x16xf32>
    %251 = arith.addf %250, %3 : vector<16x16xf32>
    %cst_109 = arith.constant dense<0xFF800000> : vector<16xf32>
    %252 = vector.multi_reduction <maximumf>, %251, %cst_109 [1] : vector<16x16xf32> to vector<16xf32>
    %253 = vector.shape_cast %252 : vector<16xf32> to vector<16x1xf32>
    %254 = vector.broadcast %253 : vector<16x1xf32> to vector<16x16xf32>
    %255 = arith.subf %251, %254 : vector<16x16xf32>
    %256 = math.exp %255 : vector<16x16xf32>
    %cst_110 = arith.constant dense<0.000000e+00> : vector<16xf32>
    %257 = vector.multi_reduction <add>, %256, %cst_110 [1] : vector<16x16xf32> to vector<16xf32>
    %258 = vector.shape_cast %257 : vector<16xf32> to vector<16x1xf32>
    %259 = vector.broadcast %258 : vector<16x1xf32> to vector<16x16xf32>
    %260 = arith.divf %256, %259 : vector<16x16xf32>
    %cst_111 = arith.constant dense<0.000000e+00> : vector<16x8xf32>
    %261 = tpu.matmul %260, %247, %cst_111 {dimension_numbers = #tpu.dot_dimension_numbers<[1], [0], [0], [1], [0, 0, 1, 1], [], []>} : vector<16x16xf32>, vector<16x8xf32>, vector<16x8xf32> -> vector<16x8xf32>
    %262 = arith.truncf %261 : vector<16x8xf32> to vector<16x8xbf16>
    %263 = vector.extract_strided_slice %222 {offsets = [8, 0], sizes = [8, 32], strides = [1, 1]} : vector<32x32xbf16> to vector<8x32xbf16>
    %cst_112 = arith.constant dense<0.000000e+00> : vector<16x32xf32>
    %264 = tpu.matmul %262, %263, %cst_112 {dimension_numbers = #tpu.dot_dimension_numbers<[1], [0], [0], [1], [0, 0, 1, 1], [], []>} : vector<16x8xbf16>, vector<8x32xbf16>, vector<16x32xf32> -> vector<16x32xf32>
    %265 = arith.addf %244, %264 : vector<16x32xf32>
    %266 = vector.extract_strided_slice %218 {offsets = [0, 16], sizes = [16, 8], strides = [1, 1]} : vector<16x32xf32> to vector<16x8xf32>
    %267 = vector.extract_strided_slice %219 {offsets = [0, 16], sizes = [16, 8], strides = [1, 1]} : vector<16x32xf32> to vector<16x8xf32>
    %268 = vector.extract_strided_slice %220 {offsets = [0, 16], sizes = [16, 8], strides = [1, 1]} : vector<16x32xf32> to vector<16x8xf32>
    %cst_113 = arith.constant dense<0.000000e+00> : vector<16x16xf32>
    %269 = tpu.matmul %266, %267, %cst_113 {dimension_numbers = #tpu.dot_dimension_numbers<[1], [1], [0], [0], [0, 0, 1, 0], [], []>} : vector<16x8xf32>, vector<16x8xf32>, vector<16x16xf32> -> vector<16x16xf32>
    %cst_114 = arith.constant 0.353553385 : f32
    %270 = vector.broadcast %cst_114 : f32 to vector<16x16xf32>
    %271 = arith.mulf %269, %270 : vector<16x16xf32>
    %272 = arith.addf %271, %3 : vector<16x16xf32>
    %cst_115 = arith.constant dense<0xFF800000> : vector<16xf32>
    %273 = vector.multi_reduction <maximumf>, %272, %cst_115 [1] : vector<16x16xf32> to vector<16xf32>
    %274 = vector.shape_cast %273 : vector<16xf32> to vector<16x1xf32>
    %275 = vector.broadcast %274 : vector<16x1xf32> to vector<16x16xf32>
    %276 = arith.subf %272, %275 : vector<16x16xf32>
    %277 = math.exp %276 : vector<16x16xf32>
    %cst_116 = arith.constant dense<0.000000e+00> : vector<16xf32>
    %278 = vector.multi_reduction <add>, %277, %cst_116 [1] : vector<16x16xf32> to vector<16xf32>
    %279 = vector.shape_cast %278 : vector<16xf32> to vector<16x1xf32>
    %280 = vector.broadcast %279 : vector<16x1xf32> to vector<16x16xf32>
    %281 = arith.divf %277, %280 : vector<16x16xf32>
    %cst_117 = arith.constant dense<0.000000e+00> : vector<16x8xf32>
    %282 = tpu.matmul %281, %268, %cst_117 {dimension_numbers = #tpu.dot_dimension_numbers<[1], [0], [0], [1], [0, 0, 1, 1], [], []>} : vector<16x16xf32>, vector<16x8xf32>, vector<16x8xf32> -> vector<16x8xf32>
    %283 = arith.truncf %282 : vector<16x8xf32> to vector<16x8xbf16>
    %284 = vector.extract_strided_slice %222 {offsets = [16, 0], sizes = [8, 32], strides = [1, 1]} : vector<32x32xbf16> to vector<8x32xbf16>
    %cst_118 = arith.constant dense<0.000000e+00> : vector<16x32xf32>
    %285 = tpu.matmul %283, %284, %cst_118 {dimension_numbers = #tpu.dot_dimension_numbers<[1], [0], [0], [1], [0, 0, 1, 1], [], []>} : vector<16x8xbf16>, vector<8x32xbf16>, vector<16x32xf32> -> vector<16x32xf32>
    %286 = arith.addf %265, %285 : vector<16x32xf32>
    %287 = vector.extract_strided_slice %218 {offsets = [0, 24], sizes = [16, 8], strides = [1, 1]} : vector<16x32xf32> to vector<16x8xf32>
    %288 = vector.extract_strided_slice %219 {offsets = [0, 24], sizes = [16, 8], strides = [1, 1]} : vector<16x32xf32> to vector<16x8xf32>
    %289 = vector.extract_strided_slice %220 {offsets = [0, 24], sizes = [16, 8], strides = [1, 1]} : vector<16x32xf32> to vector<16x8xf32>
    %cst_119 = arith.constant dense<0.000000e+00> : vector<16x16xf32>
    %290 = tpu.matmul %287, %288, %cst_119 {dimension_numbers = #tpu.dot_dimension_numbers<[1], [1], [0], [0], [0, 0, 1, 0], [], []>} : vector<16x8xf32>, vector<16x8xf32>, vector<16x16xf32> -> vector<16x16xf32>
    %cst_120 = arith.constant 0.353553385 : f32
    %291 = vector.broadcast %cst_120 : f32 to vector<16x16xf32>
    %292 = arith.mulf %290, %291 : vector<16x16xf32>
    %293 = arith.addf %292, %3 : vector<16x16xf32>
    %cst_121 = arith.constant dense<0xFF800000> : vector<16xf32>
    %294 = vector.multi_reduction <maximumf>, %293, %cst_121 [1] : vector<16x16xf32> to vector<16xf32>
    %295 = vector.shape_cast %294 : vector<16xf32> to vector<16x1xf32>
    %296 = vector.broadcast %295 : vector<16x1xf32> to vector<16x16xf32>
    %297 = arith.subf %293, %296 : vector<16x16xf32>
    %298 = math.exp %297 : vector<16x16xf32>
    %cst_122 = arith.constant dense<0.000000e+00> : vector<16xf32>
    %299 = vector.multi_reduction <add>, %298, %cst_122 [1] : vector<16x16xf32> to vector<16xf32>
    %300 = vector.shape_cast %299 : vector<16xf32> to vector<16x1xf32>
    %301 = vector.broadcast %300 : vector<16x1xf32> to vector<16x16xf32>
    %302 = arith.divf %298, %301 : vector<16x16xf32>
    %cst_123 = arith.constant dense<0.000000e+00> : vector<16x8xf32>
    %303 = tpu.matmul %302, %289, %cst_123 {dimension_numbers = #tpu.dot_dimension_numbers<[1], [0], [0], [1], [0, 0, 1, 1], [], []>} : vector<16x16xf32>, vector<16x8xf32>, vector<16x8xf32> -> vector<16x8xf32>
    %304 = arith.truncf %303 : vector<16x8xf32> to vector<16x8xbf16>
    %305 = vector.extract_strided_slice %222 {offsets = [24, 0], sizes = [8, 32], strides = [1, 1]} : vector<32x32xbf16> to vector<8x32xbf16>
    %cst_124 = arith.constant dense<0.000000e+00> : vector<16x32xf32>
    %306 = tpu.matmul %304, %305, %cst_124 {dimension_numbers = #tpu.dot_dimension_numbers<[1], [0], [0], [1], [0, 0, 1, 1], [], []>} : vector<16x8xbf16>, vector<8x32xbf16>, vector<16x32xf32> -> vector<16x32xf32>
    %307 = arith.addf %286, %306 : vector<16x32xf32>
    %308 = arith.addf %183, %307 : vector<16x32xf32>
    %c1_125 = arith.constant 1 : index
    %c0_126 = arith.constant 0 : index
    %c0_127 = arith.constant 0 : index
    %309 = vector.load %arg9[%c1_125, %c0_126, %c0_127] : memref<2x1x32xf32, #tpu.memory_space<vmem>>, vector<1x1x32xf32>
    %310 = vector.shape_cast %309 : vector<1x1x32xf32> to vector<1x32xf32>
    %311 = vector.broadcast %310 : vector<1x32xf32> to vector<16x32xf32>
    %312 = arith.addf %308, %311 : vector<16x32xf32>
    %c1_128 = arith.constant 1 : index
    %c0_129 = arith.constant 0 : index
    %c0_130 = arith.constant 0 : index
    %313 = vector.load %arg10[%c1_128, %c0_129, %c0_130] : memref<2x1x32xf32, #tpu.memory_space<vmem>>, vector<1x1x32xf32>
    %314 = vector.shape_cast %313 : vector<1x1x32xf32> to vector<1x32xf32>
    %c1_131 = arith.constant 1 : index
    %c0_132 = arith.constant 0 : index
    %c0_133 = arith.constant 0 : index
    %315 = vector.load %arg11[%c1_131, %c0_132, %c0_133] : memref<2x1x32xf32, #tpu.memory_space<vmem>>, vector<1x1x32xf32>
    %316 = vector.shape_cast %315 : vector<1x1x32xf32> to vector<1x32xf32>
    %cst_134 = arith.constant dense<0.000000e+00> : vector<16xf32>
    %317 = vector.multi_reduction <add>, %312, %cst_134 [1] : vector<16x32xf32> to vector<16xf32>
    %318 = vector.shape_cast %317 : vector<16xf32> to vector<16x1xf32>
    %cst_135 = arith.constant 3.200000e+01 : f32
    %319 = vector.broadcast %cst_135 : f32 to vector<16x1xf32>
    %320 = arith.divf %318, %319 : vector<16x1xf32>
    %321 = vector.broadcast %320 : vector<16x1xf32> to vector<16x32xf32>
    %322 = arith.subf %312, %321 : vector<16x32xf32>
    %323 = arith.mulf %322, %322 : vector<16x32xf32>
    %cst_136 = arith.constant dense<0.000000e+00> : vector<16xf32>
    %324 = vector.multi_reduction <add>, %323, %cst_136 [1] : vector<16x32xf32> to vector<16xf32>
    %325 = vector.shape_cast %324 : vector<16xf32> to vector<16x1xf32>
    %cst_137 = arith.constant 3.200000e+01 : f32
    %326 = vector.broadcast %cst_137 : f32 to vector<16x1xf32>
    %327 = arith.divf %325, %326 : vector<16x1xf32>
    %328 = vector.broadcast %320 : vector<16x1xf32> to vector<16x32xf32>
    %329 = arith.subf %312, %328 : vector<16x32xf32>
    %cst_138 = arith.constant 9.99999974E-6 : f32
    %330 = vector.broadcast %cst_138 : f32 to vector<16x1xf32>
    %331 = arith.addf %327, %330 : vector<16x1xf32>
    %332 = math.rsqrt %331 : vector<16x1xf32>
    %333 = vector.broadcast %332 : vector<16x1xf32> to vector<16x32xf32>
    %334 = arith.mulf %329, %333 : vector<16x32xf32>
    %335 = vector.broadcast %314 : vector<1x32xf32> to vector<16x32xf32>
    %336 = arith.mulf %334, %335 : vector<16x32xf32>
    %337 = vector.broadcast %316 : vector<1x32xf32> to vector<16x32xf32>
    %338 = arith.addf %336, %337 : vector<16x32xf32>
    %339 = arith.truncf %338 : vector<16x32xf32> to vector<16x32xbf16>
    %c1_139 = arith.constant 1 : index
    %c0_140 = arith.constant 0 : index
    %c0_141 = arith.constant 0 : index
    %340 = vector.load %arg12[%c1_139, %c0_140, %c0_141] : memref<2x32x128xbf16, #tpu.memory_space<vmem>>, vector<1x32x128xbf16>
    %341 = vector.shape_cast %340 : vector<1x32x128xbf16> to vector<32x128xbf16>
    %cst_142 = arith.constant dense<0.000000e+00> : vector<16x128xf32>
    %342 = tpu.matmul %339, %341, %cst_142 {dimension_numbers = #tpu.dot_dimension_numbers<[1], [0], [0], [1], [0, 0, 1, 1], [], []>} : vector<16x32xbf16>, vector<32x128xbf16>, vector<16x128xf32> -> vector<16x128xf32>
    %c1_143 = arith.constant 1 : index
    %c0_144 = arith.constant 0 : index
    %c0_145 = arith.constant 0 : index
    %343 = vector.load %arg13[%c1_143, %c0_144, %c0_145] : memref<2x1x128xf32, #tpu.memory_space<vmem>>, vector<1x1x128xf32>
    %344 = vector.shape_cast %343 : vector<1x1x128xf32> to vector<1x128xf32>
    %345 = vector.broadcast %344 : vector<1x128xf32> to vector<16x128xf32>
    %346 = arith.addf %342, %345 : vector<16x128xf32>
    %cst_146 = arith.constant 1.702000e+00 : f32
    %347 = vector.broadcast %cst_146 : f32 to vector<16x128xf32>
    %348 = arith.mulf %347, %346 : vector<16x128xf32>
    %349 = arith.negf %348 : vector<16x128xf32>
    %350 = math.exp %349 : vector<16x128xf32>
    %cst_147 = arith.constant 1.000000e+00 : f32
    %351 = vector.broadcast %cst_147 : f32 to vector<16x128xf32>
    %352 = arith.addf %351, %350 : vector<16x128xf32>
    %353 = arith.divf %351, %352 : vector<16x128xf32>
    %354 = arith.mulf %346, %353 : vector<16x128xf32>
    %355 = arith.truncf %354 : vector<16x128xf32> to vector<16x128xbf16>
    %c1_148 = arith.constant 1 : index
    %c0_149 = arith.constant 0 : index
    %c0_150 = arith.constant 0 : index
    %356 = vector.load %arg14[%c1_148, %c0_149, %c0_150] : memref<2x128x32xbf16, #tpu.memory_space<vmem>>, vector<1x128x32xbf16>
    %357 = vector.shape_cast %356 : vector<1x128x32xbf16> to vector<128x32xbf16>
    %cst_151 = arith.constant dense<0.000000e+00> : vector<16x32xf32>
    %358 = tpu.matmul %355, %357, %cst_151 {dimension_numbers = #tpu.dot_dimension_numbers<[1], [0], [0], [1], [0, 0, 1, 1], [], []>} : vector<16x128xbf16>, vector<128x32xbf16>, vector<16x32xf32> -> vector<16x32xf32>
    %c1_152 = arith.constant 1 : index
    %c0_153 = arith.constant 0 : index
    %c0_154 = arith.constant 0 : index
    %359 = vector.load %arg15[%c1_152, %c0_153, %c0_154] : memref<2x1x32xf32, #tpu.memory_space<vmem>>, vector<1x1x32xf32>
    %360 = vector.shape_cast %359 : vector<1x1x32xf32> to vector<1x32xf32>
    %361 = vector.broadcast %360 : vector<1x32xf32> to vector<16x32xf32>
    %362 = arith.addf %358, %361 : vector<16x32xf32>
    %363 = arith.addf %312, %362 : vector<16x32xf32>
    %c0_155 = arith.constant 0 : index
    %c0_156 = arith.constant 0 : index
    %364 = vector.load %arg3[%c0_155, %c0_156] : memref<2x16xf32, #tpu.memory_space<vmem>>, vector<2x16xf32>
    %cst_157 = arith.constant dense<0.000000e+00> : vector<2x32xf32>
    %365 = tpu.matmul %364, %363, %cst_157 {dimension_numbers = #tpu.dot_dimension_numbers<[1], [0], [0], [1], [0, 0, 1, 1], [], []>} : vector<2x16xf32>, vector<16x32xf32>, vector<2x32xf32> -> vector<2x32xf32>
    %c0_158 = arith.constant 0 : index
    %c0_159 = arith.constant 0 : index
    %366 = vector.load %arg16[%c0_158, %c0_159] : memref<1x32xf32, #tpu.memory_space<vmem>>, vector<1x32xf32>
    %c0_160 = arith.constant 0 : index
    %c0_161 = arith.constant 0 : index
    %367 = vector.load %arg17[%c0_160, %c0_161] : memref<1x32xf32, #tpu.memory_space<vmem>>, vector<1x32xf32>
    %cst_162 = arith.constant dense<0.000000e+00> : vector<2xf32>
    %368 = vector.multi_reduction <add>, %365, %cst_162 [1] : vector<2x32xf32> to vector<2xf32>
    %369 = vector.shape_cast %368 : vector<2xf32> to vector<2x1xf32>
    %cst_163 = arith.constant 3.200000e+01 : f32
    %370 = vector.broadcast %cst_163 : f32 to vector<2x1xf32>
    %371 = arith.divf %369, %370 : vector<2x1xf32>
    %372 = vector.broadcast %371 : vector<2x1xf32> to vector<2x32xf32>
    %373 = arith.subf %365, %372 : vector<2x32xf32>
    %374 = arith.mulf %373, %373 : vector<2x32xf32>
    %cst_164 = arith.constant dense<0.000000e+00> : vector<2xf32>
    %375 = vector.multi_reduction <add>, %374, %cst_164 [1] : vector<2x32xf32> to vector<2xf32>
    %376 = vector.shape_cast %375 : vector<2xf32> to vector<2x1xf32>
    %cst_165 = arith.constant 3.200000e+01 : f32
    %377 = vector.broadcast %cst_165 : f32 to vector<2x1xf32>
    %378 = arith.divf %376, %377 : vector<2x1xf32>
    %379 = vector.broadcast %371 : vector<2x1xf32> to vector<2x32xf32>
    %380 = arith.subf %365, %379 : vector<2x32xf32>
    %cst_166 = arith.constant 9.99999974E-6 : f32
    %381 = vector.broadcast %cst_166 : f32 to vector<2x1xf32>
    %382 = arith.addf %378, %381 : vector<2x1xf32>
    %383 = math.rsqrt %382 : vector<2x1xf32>
    %384 = vector.broadcast %383 : vector<2x1xf32> to vector<2x32xf32>
    %385 = arith.mulf %380, %384 : vector<2x32xf32>
    %386 = vector.broadcast %366 : vector<1x32xf32> to vector<2x32xf32>
    %387 = arith.mulf %385, %386 : vector<2x32xf32>
    %388 = vector.broadcast %367 : vector<1x32xf32> to vector<2x32xf32>
    %389 = arith.addf %387, %388 : vector<2x32xf32>
    %390 = arith.truncf %389 : vector<2x32xf32> to vector<2x32xbf16>
    %c0_167 = arith.constant 0 : index
    %c0_168 = arith.constant 0 : index
    %391 = vector.load %arg18[%c0_167, %c0_168] : memref<32x64xbf16, #tpu.memory_space<vmem>>, vector<32x64xbf16>
    %cst_169 = arith.constant dense<0.000000e+00> : vector<2x64xf32>
    %392 = tpu.matmul %390, %391, %cst_169 {dimension_numbers = #tpu.dot_dimension_numbers<[1], [0], [0], [1], [0, 0, 1, 1], [], []>} : vector<2x32xbf16>, vector<32x64xbf16>, vector<2x64xf32> -> vector<2x64xf32>
    %c0_170 = arith.constant 0 : index
    %c0_171 = arith.constant 0 : index
    %393 = vector.load %arg19[%c0_170, %c0_171] : memref<2x64xf32, #tpu.memory_space<vmem>>, vector<2x64xf32>
    tpu.vector_store %arg19[%c0_170, %c0_171], %392 {strides = array<i32>} : memref<2x64xf32, #tpu.memory_space<vmem>>, vector<2x64xf32>,
    return
  }
}

</mosaic_0001>

<llo_original>
// kernel: tpu_custom_call.1
$region0: #{tpu_custom_call.1}
  #allocation0 [shape = 'u32[]', space=smem, size = 0x4, offset = 0x4, fixed_abs, tag = 'smem constant byte address 0x4 - core index']
  #allocation1 [shape = 'u32[72,128]{1,0:T(1,128)}', space=vmem, size = 0x9000, scoped, tag = 'internal scratch']
  %s0 = inlined_call_operand.vmem [shape: f32[16,32], index: 0, kind: input, shape index: {}]
  %s1 = inlined_call_operand.vmem [shape: f32[16,32], index: 1, kind: input, shape index: {}]
  %s2 = inlined_call_operand.vmem [shape: f32[16,16], index: 2, kind: input, shape index: {}]
  %s3 = inlined_call_operand.hbm [shape: f32[2,16], index: 3, kind: input, shape index: {}]
  %s4 = inlined_call_operand.vmem [shape: f32[2,1,32], index: 4, kind: input, shape index: {}]
  %s5 = inlined_call_operand.hbm [shape: f32[2,1,32], index: 5, kind: input, shape index: {}]
  %s6 = inlined_call_operand.vmem [shape: bf16[2,32,96], index: 6, kind: input, shape index: {}]
  %s7 = inlined_call_operand.vmem [shape: f32[2,1,96], index: 7, kind: input, shape index: {}]
  %s8 = inlined_call_operand.vmem [shape: bf16[2,32,32], index: 8, kind: input, shape index: {}]
  %s9 = inlined_call_operand.vmem [shape: f32[2,1,32], index: 9, kind: input, shape index: {}]
  %s10 = inlined_call_operand.vmem [shape: f32[2,1,32], index: 10, kind: input, shape index: {}]
  %s11 = inlined_call_operand.hbm [shape: f32[2,1,32], index: 11, kind: input, shape index: {}]
  %s12 = inlined_call_operand.vmem [shape: bf16[2,32,128], index: 12, kind: input, shape index: {}]
  %s13 = inlined_call_operand.vmem [shape: f32[2,1,128], index: 13, kind: input, shape index: {}]
  %s14 = inlined_call_operand.vmem [shape: bf16[2,128,32], index: 14, kind: input, shape index: {}]
  %s15 = inlined_call_operand.vmem [shape: f32[2,1,32], index: 15, kind: input, shape index: {}]
  %s16 = inlined_call_operand.vmem [shape: f32[1,32], index: 16, kind: input, shape index: {}]
  %s17 = inlined_call_operand.vmem [shape: f32[1,32], index: 17, kind: input, shape index: {}]
  %s18 = inlined_call_operand.vmem [shape: bf16[32,64], index: 18, kind: input, shape index: {}]
  %s19 = inlined_call_operand.hbm [shape: f32[2,64], index: 19, kind: output, shape index: {}]
  %s20 = sld [smem:[#allocation0]]
  $region98: #{tpu_custom_call.1} parent=0
    _
  %s22 = ssub.s32 1, %s20
  %s23 = scalar_select 0, %s22, %s20
  $region1: #{tpu_custom_call.1} parent=0
    #allocation2 [shape = 'u8[1024]{0}', space=vmem, size = 0x400, scoped, tag = 'input window, operand 3, single buffered']
    #allocation3 [shape = 's32[1]{0}', space=sflag, size = 0x4, scoped, tag = 'scoped memory for tpu_custom_call.1']
    #allocation4 [shape = 's32[1]{0}', space=sflag, size = 0x4, scoped, tag = 'scoped memory for tpu_custom_call.1']
    #allocation5 [shape = 'u8[1024]{0}', space=vmem, size = 0x400, scoped, tag = 'input window, operand 5, single buffered']
    #allocation6 [shape = 's32[1]{0}', space=sflag, size = 0x4, scoped, tag = 'scoped memory for tpu_custom_call.1']
    #allocation7 [shape = 'u8[1024]{0}', space=vmem, size = 0x400, scoped, tag = 'input window, operand 11, single buffered']
    #allocation8 [shape = 'u8[1024]{0}', space=vmem, size = 0x400, scoped, tag = 'output window, operand 0, single buffered']
    %24 = vsyncpa [#allocation3], 0
    %25 = vsyncpa [#allocation6], 0
    %26 = vsyncpa [#allocation4], 0
    // Predicated region
    $region2: #{tpu_custom_call.1} parent=1 // pred_check
      _
    $region3: #{tpu_custom_call.1} parent=1 // pred_check_branch
      %28 = sbr.rel (0) target = $region5
    $region4: #{tpu_custom_call.1} parent=1 // pred_region
      _
    $region5: #{tpu_custom_call.1} parent=1 // pred_fallthru
      _
    // Predicated region
    $region6: #{tpu_custom_call.1} parent=1 // pred_check
      _
    $region7: #{tpu_custom_call.1} parent=1 // pred_check_branch
      %30 = sbr.rel (0) target = $region9
    $region8: #{tpu_custom_call.1} parent=1 // pred_region
      _
    $region9: #{tpu_custom_call.1} parent=1 // pred_fallthru
      _
    // Predicated region
    $region10: #{tpu_custom_call.1} parent=1 // pred_check
      _
    $region11: #{tpu_custom_call.1} parent=1 // pred_check_branch
      %32 = sbr.rel (0) target = $region13
    $region12: #{tpu_custom_call.1} parent=1 // pred_region
      _
    $region13: #{tpu_custom_call.1} parent=1 // pred_fallthru
      _
    // Predicated region
    $region14: #{tpu_custom_call.1} parent=1 // pred_check
      _
    $region15: #{tpu_custom_call.1} parent=1 // pred_check_branch
      %34 = sbr.rel (0) target = $region17
    $region16: #{tpu_custom_call.1} parent=1 // pred_region
      %36 = vsyncadd [#allocation3], 0
      %s38 = sshll.u32 %s3, 4
      %s39 = int_to_ptr.hbm [resolvable:$true] %s38
      %s40 = sshll.u32 [#allocation2], 4
      %s41 = int_to_ptr.vmem [resolvable:$true] %s40
      %43 = dma.hbm_to_vmem [thread:$0]  %s39, 32, %s41, [#allocation3]
    $region17: #{tpu_custom_call.1} parent=1 // pred_fallthru
      _
    // Predicated region
    $region18: #{tpu_custom_call.1} parent=1 // pred_check
      _
    $region19: #{tpu_custom_call.1} parent=1 // pred_check_branch
      %45 = sbr.rel (0) target = $region21
    $region20: #{tpu_custom_call.1} parent=1 // pred_region
      _
    $region21: #{tpu_custom_call.1} parent=1 // pred_fallthru
      _
    // Predicated region
    $region22: #{tpu_custom_call.1} parent=1 // pred_check
      _
    $region23: #{tpu_custom_call.1} parent=1 // pred_check_branch
      %47 = sbr.rel (0) target = $region25
    $region24: #{tpu_custom_call.1} parent=1 // pred_region
      %49 = vsyncadd [#allocation6], 0
      %s50 = sshll.u32 %s5, 4
      %s51 = int_to_ptr.hbm [resolvable:$true] %s50
      %s52 = sshll.u32 [#allocation5], 4
      %s53 = int_to_ptr.vmem [resolvable:$true] %s52
      %58 = dma.hbm_to_vmem [thread:$0]  %s51, 32, %s53, [#allocation6], 16, 16, 1
    $region25: #{tpu_custom_call.1} parent=1 // pred_fallthru
      _
    // Predicated region
    $region26: #{tpu_custom_call.1} parent=1 // pred_check
      _
    $region27: #{tpu_custom_call.1} parent=1 // pred_check_branch
      %60 = sbr.rel (0) target = $region29
    $region28: #{tpu_custom_call.1} parent=1 // pred_region
      _
    $region29: #{tpu_custom_call.1} parent=1 // pred_fallthru
      _
    // Predicated region
    $region30: #{tpu_custom_call.1} parent=1 // pred_check
      _
    $region31: #{tpu_custom_call.1} parent=1 // pred_check_branch
      %62 = sbr.rel (0) target = $region33
    $region32: #{tpu_custom_call.1} parent=1 // pred_region
      _
    $region33: #{tpu_custom_call.1} parent=1 // pred_fallthru
      _
    // Predicated region
    $region34: #{tpu_custom_call.1} parent=1 // pred_check
      _
    $region35: #{tpu_custom_call.1} parent=1 // pred_check_branch
      %64 = sbr.rel (0) target = $region37
    $region36: #{tpu_custom_call.1} parent=1 // pred_region
      _
    $region37: #{tpu_custom_call.1} parent=1 // pred_fallthru
      _
    // Predicated region
    $region38: #{tpu_custom_call.1} parent=1 // pred_check
      _
    $region39: #{tpu_custom_call.1} parent=1 // pred_check_branch
      %66 = sbr.rel (0) target = $region41
    $region40: #{tpu_custom_call.1} parent=1 // pred_region
      _
    $region41: #{tpu_custom_call.1} parent=1 // pred_fallthru
      _
    // Predicated region
    $region42: #{tpu_custom_call.1} parent=1 // pred_check
      _
    $region43: #{tpu_custom_call.1} parent=1 // pred_check_branch
      %68 = sbr.rel (0) target = $region45
    $region44: #{tpu_custom_call.1} parent=1 // pred_region
      _
    $region45: #{tpu_custom_call.1} parent=1 // pred_fallthru
      _
    // Predicated region
    $region46: #{tpu_custom_call.1} parent=1 // pred_check
      _
    $region47: #{tpu_custom_call.1} parent=1 // pred_check_branch
      %70 = sbr.rel (0) target = $region49
    $region48: #{tpu_custom_call.1} parent=1 // pred_region
      %72 = vsyncadd [#allocation6], 0
      %s73 = sshll.u32 %s11, 4
      %s74 = int_to_ptr.hbm [resolvable:$true] %s73
      %s75 = sshll.u32 [#allocation7], 4
      %s76 = int_to_ptr.vmem [resolvable:$true] %s75
      %81 = dma.hbm_to_vmem [thread:$0]  %s74, 32, %s76, [#allocation6], 16, 16, 1
    $region49: #{tpu_custom_call.1} parent=1 // pred_fallthru
      _
    // Predicated region
    $region50: #{tpu_custom_call.1} parent=1 // pred_check
      _
    $region51: #{tpu_custom_call.1} parent=1 // pred_check_branch
      %83 = sbr.rel (0) target = $region53
    $region52: #{tpu_custom_call.1} parent=1 // pred_region
      _
    $region53: #{tpu_custom_call.1} parent=1 // pred_fallthru
      _
    // Predicated region
    $region54: #{tpu_custom_call.1} parent=1 // pred_check
      _
    $region55: #{tpu_custom_call.1} parent=1 // pred_check_branch
      %85 = sbr.rel (0) target = $region57
    $region56: #{tpu_custom_call.1} parent=1 // pred_region
      _
    $region57: #{tpu_custom_call.1} parent=1 // pred_fallthru
      _
    // Predicated region
    $region58: #{tpu_custom_call.1} parent=1 // pred_check
      _
    $region59: #{tpu_custom_call.1} parent=1 // pred_check_branch
      %87 = sbr.rel (0) target = $region61
    $region60: #{tpu_custom_call.1} parent=1 // pred_region
      _
    $region61: #{tpu_custom_call.1} parent=1 // pred_fallthru
      _
    // Predicated region
    $region62: #{tpu_custom_call.1} parent=1 // pred_check
      _
    $region63: #{tpu_custom_call.1} parent=1 // pred_check_branch
      %89 = sbr.rel (0) target = $region65
    $region64: #{tpu_custom_call.1} parent=1 // pred_region
      _
    $region65: #{tpu_custom_call.1} parent=1 // pred_fallthru
      _
    // Predicated region
    $region66: #{tpu_custom_call.1} parent=1 // pred_check
      _
    $region67: #{tpu_custom_call.1} parent=1 // pred_check_branch
      %91 = sbr.rel (0) target = $region69
    $region68: #{tpu_custom_call.1} parent=1 // pred_region
      _
    $region69: #{tpu_custom_call.1} parent=1 // pred_fallthru
      _
    // Predicated region
    $region70: #{tpu_custom_call.1} parent=1 // pred_check
      _
    $region71: #{tpu_custom_call.1} parent=1 // pred_check_branch
      %93 = sbr.rel (0) target = $region73
    $region72: #{tpu_custom_call.1} parent=1 // pred_region
      _
    $region73: #{tpu_custom_call.1} parent=1 // pred_fallthru
      _
    // Predicated region
    $region74: #{tpu_custom_call.1} parent=1 // pred_check
      _
    $region75: #{tpu_custom_call.1} parent=1 // pred_check_branch
      %95 = sbr.rel (0) target = $region77
    $region76: #{tpu_custom_call.1} parent=1 // pred_region
      _
    $region77: #{tpu_custom_call.1} parent=1 // pred_fallthru
      _
    // Predicated region
    $region78: #{tpu_custom_call.1} parent=1 // pred_check
      _
    $region79: #{tpu_custom_call.1} parent=1 // pred_check_branch
      %97 = sbr.rel (0) target = $region81
    $region80: #{tpu_custom_call.1} parent=1 // pred_region
      %99 = dma.done [#allocation3], 32
    $region81: #{tpu_custom_call.1} parent=1 // pred_fallthru
      _
    // Predicated region
    $region82: #{tpu_custom_call.1} parent=1 // pred_check
      _
    $region83: #{tpu_custom_call.1} parent=1 // pred_check_branch
      %101 = sbr.rel (0) target = $region85
    $region84: #{tpu_custom_call.1} parent=1 // pred_region
      %103 = dma.done [#allocation6], 32
    $region85: #{tpu_custom_call.1} parent=1 // pred_fallthru
      _
    // Predicated region
    $region86: #{tpu_custom_call.1} parent=1 // pred_check
      _
    $region87: #{tpu_custom_call.1} parent=1 // pred_check_branch
      %105 = sbr.rel (0) target = $region89
    $region88: #{tpu_custom_call.1} parent=1 // pred_region
      %107 = dma.done [#allocation6], 32
    $region89: #{tpu_custom_call.1} parent=1 // pred_fallthru
      _
    %v109 = vld [vmem:[%s0] sm:$0xff]
    %v110 = vld [vmem:[%s0 + $0x8] sm:$0xff]
    %v111 = vld [vmem:[%s1] sm:$0xff]
    %v112 = vld [vmem:[%s1 + $0x8] sm:$0xff]
    %v113 = vadd.f32 %v109, %v111
    %v114 = vadd.f32 %v110, %v112
    %v115 = vld [vmem:[%s2] sm:$0xff]
    %v116 = vld [vmem:[%s2 + $0x8] sm:$0xff]
    %v117 = vld [vmem:[%s4] sm:$0x1]
    %v118 = vld [vmem:[#allocation5] sm:$0x1]
    %vm119 = vcmask 261120
    %v120 = vsel %vm119, %v113, 0.0
    %121 = vadd.xlane.f32.xlu0 %v120
    %v122 = vpop.xlane.xlu0 %121
    %v123 = vsel %vm119, %v114, 0.0
    %124 = vadd.xlane.f32.xlu0 %v123
    %v125 = vpop.xlane.xlu0 %124
    %v126 = vrcp.pop 32.0
    %v127 = vmul.f32 32.0, %v126
    %v128 = vsub.f32 1.0, %v127
    %v129 = vmul.f32 %v126, %v128
    %v130 = vadd.f32 %v126, %v129
    %vm131 = vweird.f32 %v126
    %v132 = vsel %vm131, %v126, %v130
    %v133 = vmul.f32 %v122, %v132
    %v134 = vmul.f32 %v125, %v132
    %v135 = vsub.f32 %v113, %v133
    %v136 = vsub.f32 %v114, %v134
    %v137 = vmul.f32 %v135, %v135
    %v138 = vmul.f32 %v136, %v136
    %v139 = vsel %vm119, %v137, 0.0
    %140 = vadd.xlane.f32.xlu0 %v139
    %v141 = vpop.xlane.xlu0 %140
    %v142 = vsel %vm119, %v138, 0.0
    %143 = vadd.xlane.f32.xlu0 %v142
    %v144 = vpop.xlane.xlu0 %143
    %v145 = vmul.f32 %v141, %v132
    %v146 = vmul.f32 %v144, %v132
    %v147 = vadd.f32 %v145, 1e-05
    %v148 = vadd.f32 %v146, 1e-05
    %v149 = vrsqrt.pop %v147
    %v150 = vmul.f32 %v149, %v147
    %v151 = vmul.f32 %v150, %v149
    %v152 = vmul.f32 0.5, %v151
    %v153 = vsub.f32 1.5, %v152
    %v154 = vmul.f32 %v149, %v153
    %vm155 = vweird.f32 %v147
    %vm156 = vweird.f32 %v149
    %vm157 = vmor %vm155, %vm156
    %v158 = vsel %vm157, %v149, %v154
    %v159 = vrsqrt.pop %v148
    %v160 = vmul.f32 %v159, %v148
    %v161 = vmul.f32 %v160, %v159
    %v162 = vmul.f32 0.5, %v161
    %v163 = vsub.f32 1.5, %v162
    %v164 = vmul.f32 %v159, %v163
    %vm165 = vweird.f32 %v148
    %vm166 = vweird.f32 %v159
    %vm167 = vmor %vm165, %vm166
    %v168 = vsel %vm167, %v159, %v164
    %v169 = vmul.f32 %v135, %v158
    %v170 = vmul.f32 %v136, %v168
    %v172 = vperm.slane %v117, 0
    %v174 = vmul.f32 %v169, %v172
    %v175 = vmul.f32 %v170, %v172
    %v177 = vperm.slane %v118, 0
    %v179 = vadd.f32 %v174, %v177
    %v180 = vadd.f32 %v175, %v177
    %v181 = vpack.c.bf16 %v180, %v179
    %v182 = vld [vmem:[%s6] sm:$0xf]
    %v183 = vld [vmem:[%s6 + $0x4] sm:$0xf]
    %v184 = vld [vmem:[%s6 + $0x8] sm:$0xf]
    %v185 = vld [vmem:[%s6 + $0xc] sm:$0xf]
    %v186 = vld [vmem:[%s7] sm:$0x1]
    %v188 = vperm.slane %v186, 0
    %v194 = vunpack.c.l.b16 %v182
    %v195 = vunpack.c.l.b16 %v183
    %v196 = vunpack.c.l.b16 %v184
    %v197 = vunpack.c.l.b16 %v185
    %v198 = vpack.c.b16 %v195, %v194
    %v199 = vpack.c.b16 %v197, %v196
    %v203 = vsel %vm119, %v181, 0
    %205 = vmatpush.bf16.msra.mxu0 0
    %206 = vmatpush.bf16.msra.mxu0 0
    %207 = vmatpush.bf16.msra.mxu0 0
    %208 = vmatpush.bf16.msra.mxu0 0
    %209 = vmatpush.bf16.msra.mxu0 0
    %210 = vmatpush.bf16.msra.mxu0 0
    %211 = vmatpush.bf16.msra.mxu0 %v199
    %212 = vmatpush.bf16.msra.mxu0 %v198
    %213 = vmatmul.bf16.gmra.mxu0 %v203
    %v214 = vpop.f32.mrf.mxu0
    %v215 = vadd.f32 %v188, %v214
    %v216 = vpop.f32.mrf.mxu0
    %v217 = vadd.f32 %v188, %v216
    %218 = vdwg.mxu0
    %v219 = vld [vmem:[%s8] sm:$0xf]
    %v220 = vld [vmem:[%s8 + $0x4] sm:$0xf]
    %v221 = vld [vmem:[%s8 + $0x8] sm:$0xf]
    %v222 = vld [vmem:[%s8 + $0xc] sm:$0xf]
    %225 = vrot.lane.b32.xlu0 %v215, 96
    %v226 = vpop.permute.xlu0 %225
    %227 = vrot.lane.b32.xlu0 %v217, 96
    %v228 = vpop.permute.xlu0 %227
    %vm229 = vcmask 64512
    %v230 = vsel %vm229, %v215, 0
    %v232 = vsel %vm229, %v217, 0
    %v234 = vsel %vm229, %v226, 0
    %v236 = vsel %vm229, %v228, 0
    %238 = vmatpush.xpose.msra.mxu0 0.0
    %239 = vmatpush.xpose.msra.mxu0 0.0
    %240 = vmatpush.xpose.msra.mxu0 0.0
    %241 = vmatpush.xpose.msra.mxu0 0.0
    %242 = vmatpush.xpose.msra.mxu0 0.0
    %243 = vmatpush.xpose.msra.mxu0 0.0
    %244 = vmatpush.xpose.msra.mxu0 0.0
    %245 = vmatpush.xpose.msra.mxu0 0.0
    %246 = vmatpush.xpose.msra.mxu0 0.0
    %247 = vmatpush.xpose.msra.mxu0 0.0
    %248 = vmatpush.xpose.msra.mxu0 0.0
    %249 = vmatpush.xpose.msra.mxu0 0.0
    %250 = vmatpush.xpose.msra.mxu0 0.0
    %251 = vmatpush.xpose.msra.mxu0 0.0
    %252 = vmatpush.xpose.msra.mxu0 %v236
    %253 = vmatpush.xpose.msra.mxu0 %v234
    %254 = vmatmul.f32.gmra.mxu0 %v230
    %v255 = vpop.f32.mrf.mxu0
    %v256 = vadd.f32 0.0, %v255
    %257 = vmatmul.f32.gmra.mxu0 %v232
    %v258 = vpop.f32.mrf.mxu0
    %v259 = vadd.f32 0.0, %v258
    %260 = vdwg.mxu0
    %v261 = vmul.f32 %v256, 0.35355338
    %v262 = vmul.f32 %v259, 0.35355338
    %v263 = vadd.f32 %v261, %v115
    %v264 = vadd.f32 %v262, %v116
    %vm265 = vcmask 130048
    %v266 = vsel %vm265, %v263, -inf
    %267 = vmax.xlane.f32.xlu0 %v266
    %v268 = vpop.xlane.xlu0 %267
    %v269 = vsel %vm265, %v264, -inf
    %270 = vmax.xlane.f32.xlu0 %v269
    %v271 = vpop.xlane.xlu0 %270
    %v272 = vsub.f32 %v263, %v268
    %v273 = vsub.f32 %v264, %v271
    %v274 = vmul.f32 %v272, 1.442695
    %v275 = vpow.pop %v274
    %v276 = vmul.f32 %v273, 1.442695
    %v277 = vpow.pop %v276
    %v278 = vsel %vm265, %v275, 0.0
    %279 = vadd.xlane.f32.xlu0 %v278
    %v280 = vpop.xlane.xlu0 %279
    %v281 = vsel %vm265, %v277, 0.0
    %282 = vadd.xlane.f32.xlu0 %v281
    %v283 = vpop.xlane.xlu0 %282
    %v284 = vrcp.pop %v280
    %v285 = vmul.f32 %v280, %v284
    %v286 = vsub.f32 1.0, %v285
    %v287 = vmul.f32 %v284, %v286
    %v288 = vadd.f32 %v284, %v287
    %vm289 = vweird.f32 %v280
    %vm290 = vweird.f32 %v284
    %vm291 = vmor %vm289, %vm290
    %v292 = vsel %vm291, %v284, %v288
    %v293 = vand.u32 2147483647, %v280
    %vm294 = vcmp.eq.f32.partialorder %v293, 8.507059e+37
    %v295 = vand.u32 %v280, 2147483648
    %v296 = vor.u32 1.1754944e-38, %v295
    %v297 = vsel %vm294, %v296, %v292
    %v298 = vmul.f32 %v275, %v297
    %v299 = vrcp.pop %v283
    %v300 = vmul.f32 %v283, %v299
    %v301 = vsub.f32 1.0, %v300
    %v302 = vmul.f32 %v299, %v301
    %v303 = vadd.f32 %v299, %v302
    %vm304 = vweird.f32 %v283
    %vm305 = vweird.f32 %v299
    %vm306 = vmor %vm304, %vm305
    %v307 = vsel %vm306, %v299, %v303
    %v308 = vand.u32 2147483647, %v283
    %vm309 = vcmp.eq.f32.partialorder %v308, 8.507059e+37
    %v310 = vand.u32 %v283, 2147483648
    %v311 = vor.u32 1.1754944e-38, %v310
    %v312 = vsel %vm309, %v311, %v307
    %v313 = vmul.f32 %v277, %v312
    %314 = vrot.lane.b32.xlu0 %v215, 64
    %v315 = vpop.permute.xlu0 %314
    %316 = vrot.lane.b32.xlu0 %v217, 64
    %v317 = vpop.permute.xlu0 %316
    %v321 = vsel %vm265, %v298, 0
    %v324 = vsel %vm265, %v313, 0
    %326 = vmatpush.msra.mxu0 0.0
    %327 = vmatpush.msra.mxu0 0.0
    %328 = vmatpush.msra.mxu0 0.0
    %329 = vmatpush.msra.mxu0 0.0
    %330 = vmatpush.msra.mxu0 0.0
    %331 = vmatpush.msra.mxu0 0.0
    %332 = vmatpush.msra.mxu0 0.0
    %333 = vmatpush.msra.mxu0 0.0
    %334 = vmatpush.msra.mxu0 0.0
    %335 = vmatpush.msra.mxu0 0.0
    %336 = vmatpush.msra.mxu0 0.0
    %337 = vmatpush.msra.mxu0 0.0
    %338 = vmatpush.msra.mxu0 0.0
    %339 = vmatpush.msra.mxu0 0.0
    %340 = vmatpush.msra.mxu0 %v317
    %341 = vmatpush.msra.mxu0 %v315
    %342 = vmatmul.f32.gmra.mxu0 %v321
    %v343 = vpop.f32.mrf.mxu0
    %v344 = vadd.f32 0.0, %v343
    %345 = vmatmul.f32.gmra.mxu0 %v324
    %v346 = vpop.f32.mrf.mxu0
    %v347 = vadd.f32 0.0, %v346
    %348 = vdwg.mxu0
    %v349 = vpack.c.bf16 %v347, %v344
    %350 = vrot.lane.b32.xlu0 %v215, 120
    %v351 = vpop.permute.xlu0 %350
    %352 = vrot.lane.b32.xlu0 %v217, 120
    %v353 = vpop.permute.xlu0 %352
    %354 = vrot.lane.b32.xlu0 %v215, 88
    %v355 = vpop.permute.xlu0 %354
    %356 = vrot.lane.b32.xlu0 %v217, 88
    %v357 = vpop.permute.xlu0 %356
    %v358 = vsel %vm229, %v351, 0
    %v360 = vsel %vm229, %v353, 0
    %v362 = vsel %vm229, %v355, 0
    %v364 = vsel %vm229, %v357, 0
    %366 = vmatpush.xpose.msra.mxu0 0.0
    %367 = vmatpush.xpose.msra.mxu0 0.0
    %368 = vmatpush.xpose.msra.mxu0 0.0
    %369 = vmatpush.xpose.msra.mxu0 0.0
    %370 = vmatpush.xpose.msra.mxu0 0.0
    %371 = vmatpush.xpose.msra.mxu0 0.0
    %372 = vmatpush.xpose.msra.mxu0 0.0
    %373 = vmatpush.xpose.msra.mxu0 0.0
    %374 = vmatpush.xpose.msra.mxu0 0.0
    %375 = vmatpush.xpose.msra.mxu0 0.0
    %376 = vmatpush.xpose.msra.mxu0 0.0
    %377 = vmatpush.xpose.msra.mxu0 0.0
    %378 = vmatpush.xpose.msra.mxu0 0.0
    %379 = vmatpush.xpose.msra.mxu0 0.0
    %380 = vmatpush.xpose.msra.mxu0 %v364
    %381 = vmatpush.xpose.msra.mxu0 %v362
    %382 = vmatmul.f32.gmra.mxu0 %v358
    %v383 = vpop.f32.mrf.mxu0
    %v384 = vadd.f32 0.0, %v383
    %385 = vmatmul.f32.gmra.mxu0 %v360
    %v386 = vpop.f32.mrf.mxu0
    %v387 = vadd.f32 0.0, %v386
    %388 = vdwg.mxu0
    %v389 = vmul.f32 %v384, 0.35355338
    %v390 = vmul.f32 %v387, 0.35355338
    %v391 = vadd.f32 %v389, %v115
    %v392 = vadd.f32 %v390, %v116
    %v393 = vsel %vm265, %v391, -inf
    %394 = vmax.xlane.f32.xlu0 %v393
    %v395 = vpop.xlane.xlu0 %394
    %v396 = vsel %vm265, %v392, -inf
    %397 = vmax.xlane.f32.xlu0 %v396
    %v398 = vpop.xlane.xlu0 %397
    %v399 = vsub.f32 %v391, %v395
    %v400 = vsub.f32 %v392, %v398
    %v401 = vmul.f32 %v399, 1.442695
    %v402 = vpow.pop %v401
    %v403 = vmul.f32 %v400, 1.442695
    %v404 = vpow.pop %v403
    %v405 = vsel %vm265, %v402, 0.0
    %406 = vadd.xlane.f32.xlu0 %v405
    %v407 = vpop.xlane.xlu0 %406
    %v408 = vsel %vm265, %v404, 0.0
    %409 = vadd.xlane.f32.xlu0 %v408
    %v410 = vpop.xlane.xlu0 %409
    %v411 = vrcp.pop %v407
    %v412 = vmul.f32 %v407, %v411
    %v413 = vsub.f32 1.0, %v412
    %v414 = vmul.f32 %v411, %v413
    %v415 = vadd.f32 %v411, %v414
    %vm416 = vweird.f32 %v407
    %vm417 = vweird.f32 %v411
    %vm418 = vmor %vm416, %vm417
    %v419 = vsel %vm418, %v411, %v415
    %v420 = vand.u32 2147483647, %v407
    %vm421 = vcmp.eq.f32.partialorder %v420, 8.507059e+37
    %v422 = vand.u32 %v407, 2147483648
    %v423 = vor.u32 1.1754944e-38, %v422
    %v424 = vsel %vm421, %v423, %v419
    %v425 = vmul.f32 %v402, %v424
    %v426 = vrcp.pop %v410
    %v427 = vmul.f32 %v410, %v426
    %v428 = vsub.f32 1.0, %v427
    %v429 = vmul.f32 %v426, %v428
    %v430 = vadd.f32 %v426, %v429
    %vm431 = vweird.f32 %v410
    %vm432 = vweird.f32 %v426
    %vm433 = vmor %vm431, %vm432
    %v434 = vsel %vm433, %v426, %v430
    %v435 = vand.u32 2147483647, %v410
    %vm436 = vcmp.eq.f32.partialorder %v435, 8.507059e+37
    %v437 = vand.u32 %v410, 2147483648
    %v438 = vor.u32 1.1754944e-38, %v437
    %v439 = vsel %vm436, %v438, %v434
    %v440 = vmul.f32 %v404, %v439
    %441 = vrot.lane.b32.xlu0 %v215, 56
    %v442 = vpop.permute.xlu0 %441
    %443 = vrot.lane.b32.xlu0 %v217, 56
    %v444 = vpop.permute.xlu0 %443
    %v448 = vsel %vm265, %v425, 0
    %v451 = vsel %vm265, %v440, 0
    %453 = vmatpush.msra.mxu0 0.0
    %454 = vmatpush.msra.mxu0 0.0
    %455 = vmatpush.msra.mxu0 0.0
    %456 = vmatpush.msra.mxu0 0.0
    %457 = vmatpush.msra.mxu0 0.0
    %458 = vmatpush.msra.mxu0 0.0
    %459 = vmatpush.msra.mxu0 0.0
    %460 = vmatpush.msra.mxu0 0.0
    %461 = vmatpush.msra.mxu0 0.0
    %462 = vmatpush.msra.mxu0 0.0
    %463 = vmatpush.msra.mxu0 0.0
    %464 = vmatpush.msra.mxu0 0.0
    %465 = vmatpush.msra.mxu0 0.0
    %466 = vmatpush.msra.mxu0 0.0
    %467 = vmatpush.msra.mxu0 %v444
    %468 = vmatpush.msra.mxu0 %v442
    %469 = vmatmul.f32.gmra.mxu0 %v448
    %v470 = vpop.f32.mrf.mxu0
    %v471 = vadd.f32 0.0, %v470
    %472 = vmatmul.f32.gmra.mxu0 %v451
    %v473 = vpop.f32.mrf.mxu0
    %v474 = vadd.f32 0.0, %v473
    %475 = vdwg.mxu0
    %v476 = vpack.c.bf16 %v474, %v471
    %v478 = vsel %vm229, %v476, 0
    %vm480 = vcmask 1043456
    %v482 = vsel %vm480, %v220, 0
    %484 = vmatpush.bf16.msra.mxu0 0
    %485 = vmatpush.bf16.msra.mxu0 0
    %486 = vmatpush.bf16.msra.mxu0 0
    %487 = vmatpush.bf16.msra.mxu0 0
    %488 = vmatpush.bf16.msra.mxu0 0
    %489 = vmatpush.bf16.msra.mxu0 0
    %490 = vmatpush.bf16.msra.mxu0 0
    %491 = vmatpush.bf16.msra.mxu0 %v482
    %492 = vmatmul.bf16.gmra.mxu0 %v478
    %v493 = vpop.f32.mrf.mxu0
    %v494 = vadd.f32 0.0, %v493
    %v495 = vpop.f32.mrf.mxu0
    %v496 = vadd.f32 0.0, %v495
    %497 = vdwg.mxu0
    %v499 = vsel %vm229, %v349, 0
    %v502 = vsel %vm480, %v219, 0
    %504 = vmatpush.bf16.msra.mxu0 0
    %505 = vmatpush.bf16.msra.mxu0 0
    %506 = vmatpush.bf16.msra.mxu0 0
    %507 = vmatpush.bf16.msra.mxu0 0
    %508 = vmatpush.bf16.msra.mxu0 0
    %509 = vmatpush.bf16.msra.mxu0 0
    %510 = vmatpush.bf16.msra.mxu0 0
    %511 = vmatpush.bf16.msra.mxu0 %v502
    %512 = vmatmul.bf16.gmra.mxu0 %v499
    %v513 = vpop.f32.mrf.mxu0
    %v514 = vadd.f32 %v494, %v513
    %v515 = vpop.f32.mrf.mxu0
    %v516 = vadd.f32 %v496, %v515
    %517 = vdwg.mxu0
    %518 = vrot.lane.b32.xlu0 %v215, 112
    %v519 = vpop.permute.xlu0 %518
    %520 = vrot.lane.b32.xlu0 %v217, 112
    %v521 = vpop.permute.xlu0 %520
    %522 = vrot.lane.b32.xlu0 %v215, 80
    %v523 = vpop.permute.xlu0 %522
    %524 = vrot.lane.b32.xlu0 %v217, 80
    %v525 = vpop.permute.xlu0 %524
    %v526 = vsel %vm229, %v519, 0
    %v528 = vsel %vm229, %v521, 0
    %v530 = vsel %vm229, %v523, 0
    %v532 = vsel %vm229, %v525, 0
    %534 = vmatpush.xpose.msra.mxu0 0.0
    %535 = vmatpush.xpose.msra.mxu0 0.0
    %536 = vmatpush.xpose.msra.mxu0 0.0
    %537 = vmatpush.xpose.msra.mxu0 0.0
    %538 = vmatpush.xpose.msra.mxu0 0.0
    %539 = vmatpush.xpose.msra.mxu0 0.0
    %540 = vmatpush.xpose.msra.mxu0 0.0
    %541 = vmatpush.xpose.msra.mxu0 0.0
    %542 = vmatpush.xpose.msra.mxu0 0.0
    %543 = vmatpush.xpose.msra.mxu0 0.0
    %544 = vmatpush.xpose.msra.mxu0 0.0
    %545 = vmatpush.xpose.msra.mxu0 0.0
    %546 = vmatpush.xpose.msra.mxu0 0.0
    %547 = vmatpush.xpose.msra.mxu0 0.0
    %548 = vmatpush.xpose.msra.mxu0 %v532
    %549 = vmatpush.xpose.msra.mxu0 %v530
    %550 = vmatmul.f32.gmra.mxu0 %v526
    %v551 = vpop.f32.mrf.mxu0
    %v552 = vadd.f32 0.0, %v551
    %553 = vmatmul.f32.gmra.mxu0 %v528
    %v554 = vpop.f32.mrf.mxu0
    %v555 = vadd.f32 0.0, %v554
    %556 = vdwg.mxu0
    %v557 = vmul.f32 %v552, 0.35355338
    %v558 = vmul.f32 %v555, 0.35355338
    %v559 = vadd.f32 %v557, %v115
    %v560 = vadd.f32 %v558, %v116
    %v561 = vsel %vm265, %v559, -inf
    %562 = vmax.xlane.f32.xlu0 %v561
    %v563 = vpop.xlane.xlu0 %562
    %v564 = vsel %vm265, %v560, -inf
    %565 = vmax.xlane.f32.xlu0 %v564
    %v566 = vpop.xlane.xlu0 %565
    %v567 = vsub.f32 %v559, %v563
    %v568 = vsub.f32 %v560, %v566
    %v569 = vmul.f32 %v567, 1.442695
    %v570 = vpow.pop %v569
    %v571 = vmul.f32 %v568, 1.442695
    %v572 = vpow.pop %v571
    %v573 = vsel %vm265, %v570, 0.0
    %574 = vadd.xlane.f32.xlu0 %v573
    %v575 = vpop.xlane.xlu0 %574
    %v576 = vsel %vm265, %v572, 0.0
    %577 = vadd.xlane.f32.xlu0 %v576
    %v578 = vpop.xlane.xlu0 %577
    %v579 = vrcp.pop %v575
    %v580 = vmul.f32 %v575, %v579
    %v581 = vsub.f32 1.0, %v580
    %v582 = vmul.f32 %v579, %v581
    %v583 = vadd.f32 %v579, %v582
    %vm584 = vweird.f32 %v575
    %vm585 = vweird.f32 %v579
    %vm586 = vmor %vm584, %vm585
    %v587 = vsel %vm586, %v579, %v583
    %v588 = vand.u32 2147483647, %v575
    %vm589 = vcmp.eq.f32.partialorder %v588, 8.507059e+37
    %v590 = vand.u32 %v575, 2147483648
    %v591 = vor.u32 1.1754944e-38, %v590
    %v592 = vsel %vm589, %v591, %v587
    %v593 = vmul.f32 %v570, %v592
    %v594 = vrcp.pop %v578
    %v595 = vmul.f32 %v578, %v594
    %v596 = vsub.f32 1.0, %v595
    %v597 = vmul.f32 %v594, %v596
    %v598 = vadd.f32 %v594, %v597
    %vm599 = vweird.f32 %v578
    %vm600 = vweird.f32 %v594
    %vm601 = vmor %vm599, %vm600
    %v602 = vsel %vm601, %v594, %v598
    %v603 = vand.u32 2147483647, %v578
    %vm604 = vcmp.eq.f32.partialorder %v603, 8.507059e+37
    %v605 = vand.u32 %v578, 2147483648
    %v606 = vor.u32 1.1754944e-38, %v605
    %v607 = vsel %vm604, %v606, %v602
    %v608 = vmul.f32 %v572, %v607
    %609 = vrot.lane.b32.xlu0 %v215, 48
    %v610 = vpop.permute.xlu0 %609
    %611 = vrot.lane.b32.xlu0 %v217, 48
    %v612 = vpop.permute.xlu0 %611
    %v616 = vsel %vm265, %v593, 0
    %v619 = vsel %vm265, %v608, 0
    %621 = vmatpush.msra.mxu0 0.0
    %622 = vmatpush.msra.mxu0 0.0
    %623 = vmatpush.msra.mxu0 0.0
    %624 = vmatpush.msra.mxu0 0.0
    %625 = vmatpush.msra.mxu0 0.0
    %626 = vmatpush.msra.mxu0 0.0
    %627 = vmatpush.msra.mxu0 0.0
    %628 = vmatpush.msra.mxu0 0.0
    %629 = vmatpush.msra.mxu0 0.0
    %630 = vmatpush.msra.mxu0 0.0
    %631 = vmatpush.msra.mxu0 0.0
    %632 = vmatpush.msra.mxu0 0.0
    %633 = vmatpush.msra.mxu0 0.0
    %634 = vmatpush.msra.mxu0 0.0
    %635 = vmatpush.msra.mxu0 %v612
    %636 = vmatpush.msra.mxu0 %v610
    %637 = vmatmul.f32.gmra.mxu0 %v616
    %v638 = vpop.f32.mrf.mxu0
    %v639 = vadd.f32 0.0, %v638
    %640 = vmatmul.f32.gmra.mxu0 %v619
    %v641 = vpop.f32.mrf.mxu0
    %v642 = vadd.f32 0.0, %v641
    %643 = vdwg.mxu0
    %v644 = vpack.c.bf16 %v642, %v639
    %v646 = vsel %vm229, %v644, 0
    %v649 = vsel %vm480, %v221, 0
    %651 = vmatpush.bf16.msra.mxu0 0
    %652 = vmatpush.bf16.msra.mxu0 0
    %653 = vmatpush.bf16.msra.mxu0 0
    %654 = vmatpush.bf16.msra.mxu0 0
    %655 = vmatpush.bf16.msra.mxu0 0
    %656 = vmatpush.bf16.msra.mxu0 0
    %657 = vmatpush.bf16.msra.mxu0 0
    %658 = vmatpush.bf16.msra.mxu0 %v649
    %659 = vmatmul.bf16.gmra.mxu0 %v646
    %v660 = vpop.f32.mrf.mxu0
    %v661 = vadd.f32 0.0, %v660
    %v662 = vpop.f32.mrf.mxu0
    %v663 = vadd.f32 0.0, %v662
    %664 = vdwg.mxu0
    %v665 = vadd.f32 %v514, %v661
    %v666 = vadd.f32 %v516, %v663
    %667 = vrot.lane.b32.xlu0 %v215, 104
    %v668 = vpop.permute.xlu0 %667
    %669 = vrot.lane.b32.xlu0 %v217, 104
    %v670 = vpop.permute.xlu0 %669
    %671 = vrot.lane.b32.xlu0 %v215, 72
    %v672 = vpop.permute.xlu0 %671
    %673 = vrot.lane.b32.xlu0 %v217, 72
    %v674 = vpop.permute.xlu0 %673
    %v675 = vsel %vm229, %v668, 0
    %v677 = vsel %vm229, %v670, 0
    %v679 = vsel %vm229, %v672, 0
    %v681 = vsel %vm229, %v674, 0
    %683 = vmatpush.xpose.msra.mxu0 0.0
    %684 = vmatpush.xpose.msra.mxu0 0.0
    %685 = vmatpush.xpose.msra.mxu0 0.0
    %686 = vmatpush.xpose.msra.mxu0 0.0
    %687 = vmatpush.xpose.msra.mxu0 0.0
    %688 = vmatpush.xpose.msra.mxu0 0.0
    %689 = vmatpush.xpose.msra.mxu0 0.0
    %690 = vmatpush.xpose.msra.mxu0 0.0
    %691 = vmatpush.xpose.msra.mxu0 0.0
    %692 = vmatpush.xpose.msra.mxu0 0.0
    %693 = vmatpush.xpose.msra.mxu0 0.0
    %694 = vmatpush.xpose.msra.mxu0 0.0
    %695 = vmatpush.xpose.msra.mxu0 0.0
    %696 = vmatpush.xpose.msra.mxu0 0.0
    %697 = vmatpush.xpose.msra.mxu0 %v681
    %698 = vmatpush.xpose.msra.mxu0 %v679
    %699 = vmatmul.f32.gmra.mxu0 %v675
    %v700 = vpop.f32.mrf.mxu0
    %v701 = vadd.f32 0.0, %v700
    %702 = vmatmul.f32.gmra.mxu0 %v677
    %v703 = vpop.f32.mrf.mxu0
    %v704 = vadd.f32 0.0, %v703
    %705 = vdwg.mxu0
    %v706 = vmul.f32 %v701, 0.35355338
    %v707 = vmul.f32 %v704, 0.35355338
    %v708 = vadd.f32 %v706, %v115
    %v709 = vadd.f32 %v707, %v116
    %v710 = vsel %vm265, %v708, -inf
    %711 = vmax.xlane.f32.xlu0 %v710
    %v712 = vpop.xlane.xlu0 %711
    %v713 = vsel %vm265, %v709, -inf
    %714 = vmax.xlane.f32.xlu0 %v713
    %v715 = vpop.xlane.xlu0 %714
    %v716 = vsub.f32 %v708, %v712
    %v717 = vsub.f32 %v709, %v715
    %v718 = vmul.f32 %v716, 1.442695
    %v719 = vpow.pop %v718
    %v720 = vmul.f32 %v717, 1.442695
    %v721 = vpow.pop %v720
    %v722 = vsel %vm265, %v719, 0.0
    %723 = vadd.xlane.f32.xlu0 %v722
    %v724 = vpop.xlane.xlu0 %723
    %v725 = vsel %vm265, %v721, 0.0
    %726 = vadd.xlane.f32.xlu0 %v725
    %v727 = vpop.xlane.xlu0 %726
    %v728 = vrcp.pop %v724
    %v729 = vmul.f32 %v724, %v728
    %v730 = vsub.f32 1.0, %v729
    %v731 = vmul.f32 %v728, %v730
    %v732 = vadd.f32 %v728, %v731
    %vm733 = vweird.f32 %v724
    %vm734 = vweird.f32 %v728
    %vm735 = vmor %vm733, %vm734
    %v736 = vsel %vm735, %v728, %v732
    %v737 = vand.u32 2147483647, %v724
    %vm738 = vcmp.eq.f32.partialorder %v737, 8.507059e+37
    %v739 = vand.u32 %v724, 2147483648
    %v740 = vor.u32 1.1754944e-38, %v739
    %v741 = vsel %vm738, %v740, %v736
    %v742 = vmul.f32 %v719, %v741
    %v743 = vrcp.pop %v727
    %v744 = vmul.f32 %v727, %v743
    %v745 = vsub.f32 1.0, %v744
    %v746 = vmul.f32 %v743, %v745
    %v747 = vadd.f32 %v743, %v746
    %vm748 = vweird.f32 %v727
    %vm749 = vweird.f32 %v743
    %vm750 = vmor %vm748, %vm749
    %v751 = vsel %vm750, %v743, %v747
    %v752 = vand.u32 2147483647, %v727
    %vm753 = vcmp.eq.f32.partialorder %v752, 8.507059e+37
    %v754 = vand.u32 %v727, 2147483648
    %v755 = vor.u32 1.1754944e-38, %v754
    %v756 = vsel %vm753, %v755, %v751
    %v757 = vmul.f32 %v721, %v756
    %758 = vrot.lane.b32.xlu0 %v215, 40
    %v759 = vpop.permute.xlu0 %758
    %760 = vrot.lane.b32.xlu0 %v217, 40
    %v761 = vpop.permute.xlu0 %760
    %v765 = vsel %vm265, %v742, 0
    %v768 = vsel %vm265, %v757, 0
    %770 = vmatpush.msra.mxu0 0.0
    %771 = vmatpush.msra.mxu0 0.0
    %772 = vmatpush.msra.mxu0 0.0
    %773 = vmatpush.msra.mxu0 0.0
    %774 = vmatpush.msra.mxu0 0.0
    %775 = vmatpush.msra.mxu0 0.0
    %776 = vmatpush.msra.mxu0 0.0
    %777 = vmatpush.msra.mxu0 0.0
    %778 = vmatpush.msra.mxu0 0.0
    %779 = vmatpush.msra.mxu0 0.0
    %780 = vmatpush.msra.mxu0 0.0
    %781 = vmatpush.msra.mxu0 0.0
    %782 = vmatpush.msra.mxu0 0.0
    %783 = vmatpush.msra.mxu0 0.0
    %784 = vmatpush.msra.mxu0 %v761
    %785 = vmatpush.msra.mxu0 %v759
    %786 = vmatmul.f32.gmra.mxu0 %v765
    %v787 = vpop.f32.mrf.mxu0
    %v788 = vadd.f32 0.0, %v787
    %789 = vmatmul.f32.gmra.mxu0 %v768
    %v790 = vpop.f32.mrf.mxu0
    %v791 = vadd.f32 0.0, %v790
    %792 = vdwg.mxu0
    %v793 = vpack.c.bf16 %v791, %v788
    %v795 = vsel %vm229, %v793, 0
    %v798 = vsel %vm480, %v222, 0
    %800 = vmatpush.bf16.msra.mxu0 0
    %801 = vmatpush.bf16.msra.mxu0 0
    %802 = vmatpush.bf16.msra.mxu0 0
    %803 = vmatpush.bf16.msra.mxu0 0
    %804 = vmatpush.bf16.msra.mxu0 0
    %805 = vmatpush.bf16.msra.mxu0 0
    %806 = vmatpush.bf16.msra.mxu0 0
    %807 = vmatpush.bf16.msra.mxu0 %v798
    %808 = vmatmul.bf16.gmra.mxu0 %v795
    %v809 = vpop.f32.mrf.mxu0
    %v810 = vadd.f32 0.0, %v809
    %v811 = vpop.f32.mrf.mxu0
    %v812 = vadd.f32 0.0, %v811
    %813 = vdwg.mxu0
    %v814 = vadd.f32 %v665, %v810
    %v815 = vadd.f32 %v666, %v812
    %v816 = vadd.f32 %v113, %v814
    %v817 = vadd.f32 %v114, %v815
    %v818 = vld [vmem:[%s9] sm:$0x1]
    %v820 = vperm.slane %v818, 0
    %v822 = vadd.f32 %v816, %v820
    %v823 = vadd.f32 %v817, %v820
    %v824 = vld [vmem:[%s10] sm:$0x1]
    %v825 = vld [vmem:[#allocation7] sm:$0x1]
    %v826 = vsel %vm119, %v822, 0.0
    %827 = vadd.xlane.f32.xlu0 %v826
    %v828 = vpop.xlane.xlu0 %827
    %v829 = vsel %vm119, %v823, 0.0
    %830 = vadd.xlane.f32.xlu0 %v829
    %v831 = vpop.xlane.xlu0 %830
    %v832 = vmul.f32 %v828, %v132
    %v833 = vmul.f32 %v831, %v132
    %v834 = vsub.f32 %v822, %v832
    %v835 = vsub.f32 %v823, %v833
    %v836 = vmul.f32 %v834, %v834
    %v837 = vmul.f32 %v835, %v835
    %v838 = vsel %vm119, %v836, 0.0
    %839 = vadd.xlane.f32.xlu0 %v838
    %v840 = vpop.xlane.xlu0 %839
    %v841 = vsel %vm119, %v837, 0.0
    %842 = vadd.xlane.f32.xlu0 %v841
    %v843 = vpop.xlane.xlu0 %842
    %v844 = vmul.f32 %v840, %v132
    %v845 = vmul.f32 %v843, %v132
    %v846 = vadd.f32 %v844, 1e-05
    %v847 = vadd.f32 %v845, 1e-05
    %v848 = vrsqrt.pop %v846
    %v849 = vmul.f32 %v848, %v846
    %v850 = vmul.f32 %v849, %v848
    %v851 = vmul.f32 0.5, %v850
    %v852 = vsub.f32 1.5, %v851
    %v853 = vmul.f32 %v848, %v852
    %vm854 = vweird.f32 %v846
    %vm855 = vweird.f32 %v848
    %vm856 = vmor %vm854, %vm855
    %v857 = vsel %vm856, %v848, %v853
    %v858 = vrsqrt.pop %v847
    %v859 = vmul.f32 %v858, %v847
    %v860 = vmul.f32 %v859, %v858
    %v861 = vmul.f32 0.5, %v860
    %v862 = vsub.f32 1.5, %v861
    %v863 = vmul.f32 %v858, %v862
    %vm864 = vweird.f32 %v847
    %vm865 = vweird.f32 %v858
    %vm866 = vmor %vm864, %vm865
    %v867 = vsel %vm866, %v858, %v863
    %v868 = vmul.f32 %v834, %v857
    %v869 = vmul.f32 %v835, %v867
    %v871 = vperm.slane %v824, 0
    %v873 = vmul.f32 %v868, %v871
    %v874 = vmul.f32 %v869, %v871
    %v876 = vperm.slane %v825, 0
    %v878 = vadd.f32 %v873, %v876
    %v879 = vadd.f32 %v874, %v876
    %v880 = vpack.c.bf16 %v879, %v878
    %v881 = vld [vmem:[%s12] sm:$0xf]
    %v882 = vld [vmem:[%s12 + $0x4] sm:$0xf]
    %v883 = vld [vmem:[%s12 + $0x8] sm:$0xf]
    %v884 = vld [vmem:[%s12 + $0xc] sm:$0xf]
    %v885 = vld [vmem:[%s13] sm:$0x1]
    %v887 = vperm.slane %v885, 0
    %v893 = vunpack.c.l.b16 %v881
    %v894 = vunpack.c.l.b16 %v882
    %v895 = vunpack.c.l.b16 %v883
    %v896 = vunpack.c.l.b16 %v884
    %v897 = vpack.c.b16 %v894, %v893
    %v898 = vpack.c.b16 %v896, %v895
    %v902 = vsel %vm119, %v880, 0
    %904 = vmatpush.bf16.msra.mxu0 0
    %905 = vmatpush.bf16.msra.mxu0 0
    %906 = vmatpush.bf16.msra.mxu0 0
    %907 = vmatpush.bf16.msra.mxu0 0
    %908 = vmatpush.bf16.msra.mxu0 0
    %909 = vmatpush.bf16.msra.mxu0 0
    %910 = vmatpush.bf16.msra.mxu0 %v898
    %911 = vmatpush.bf16.msra.mxu0 %v897
    %912 = vmatmul.bf16.gmra.mxu0 %v902
    %v913 = vpop.f32.mrf.mxu0
    %v914 = vadd.f32 %v887, %v913
    %v915 = vpop.f32.mrf.mxu0
    %v916 = vadd.f32 %v887, %v915
    %917 = vdwg.mxu0
    %v918 = vmul.f32 %v914, 1.702
    %v919 = vmul.f32 %v916, 1.702
    %v920 = vxor.u32 %v918, 2147483648
    %v921 = vxor.u32 %v919, 2147483648
    %v922 = vmul.f32 %v920, 1.442695
    %v923 = vpow.pop %v922
    %v924 = vmul.f32 %v921, 1.442695
    %v925 = vpow.pop %v924
    %v926 = vadd.f32 %v923, 1.0
    %v927 = vadd.f32 %v925, 1.0
    %v928 = vrcp.pop %v926
    %v929 = vmul.f32 %v926, %v928
    %v930 = vsub.f32 1.0, %v929
    %v931 = vmul.f32 %v928, %v930
    %v932 = vadd.f32 %v928, %v931
    %vm933 = vweird.f32 %v926
    %vm934 = vweird.f32 %v928
    %vm935 = vmor %vm933, %vm934
    %v936 = vsel %vm935, %v928, %v932
    %v937 = vand.u32 2147483647, %v926
    %vm938 = vcmp.eq.f32.partialorder %v937, 8.507059e+37
    %v939 = vand.u32 %v926, 2147483648
    %v940 = vor.u32 1.1754944e-38, %v939
    %v941 = vsel %vm938, %v940, %v936
    %v942 = vmul.f32 1.0, %v941
    %v943 = vrcp.pop %v927
    %v944 = vmul.f32 %v927, %v943
    %v945 = vsub.f32 1.0, %v944
    %v946 = vmul.f32 %v943, %v945
    %v947 = vadd.f32 %v943, %v946
    %vm948 = vweird.f32 %v927
    %vm949 = vweird.f32 %v943
    %vm950 = vmor %vm948, %vm949
    %v951 = vsel %vm950, %v943, %v947
    %v952 = vand.u32 2147483647, %v927
    %vm953 = vcmp.eq.f32.partialorder %v952, 8.507059e+37
    %v954 = vand.u32 %v927, 2147483648
    %v955 = vor.u32 1.1754944e-38, %v954
    %v956 = vsel %vm953, %v955, %v951
    %v957 = vmul.f32 1.0, %v956
    %v958 = vmul.f32 %v914, %v942
    %v959 = vmul.f32 %v916, %v957
    %v960 = vpack.c.bf16 %v959, %v958
    %v961 = vld [vmem:[%s14] sm:$0xf]
    %v962 = vld [vmem:[%s14 + $0x4] sm:$0xf]
    %v963 = vld [vmem:[%s14 + $0x8] sm:$0xf]
    %v964 = vld [vmem:[%s14 + $0xc] sm:$0xf]
    %v965 = vld [vmem:[%s14 + $0x10] sm:$0xf]
    %v966 = vld [vmem:[%s14 + $0x14] sm:$0xf]
    %v967 = vld [vmem:[%s14 + $0x18] sm:$0xf]
    %v968 = vld [vmem:[%s14 + $0x1c] sm:$0xf]
    %v969 = vld [vmem:[%s14 + $0x20] sm:$0xf]
    %v970 = vld [vmem:[%s14 + $0x24] sm:$0xf]
    %v971 = vld [vmem:[%s14 + $0x28] sm:$0xf]
    %v972 = vld [vmem:[%s14 + $0x2c] sm:$0xf]
    %v973 = vld [vmem:[%s14 + $0x30] sm:$0xf]
    %v974 = vld [vmem:[%s14 + $0x34] sm:$0xf]
    %v975 = vld [vmem:[%s14 + $0x38] sm:$0xf]
    %v976 = vld [vmem:[%s14 + $0x3c] sm:$0xf]
    %v977 = vld [vmem:[%s15] sm:$0x1]
    %v979 = vperm.slane %v977, 0
    %v997 = vunpack.c.l.b16 %v961
    %v998 = vunpack.c.l.b16 %v962
    %v999 = vunpack.c.l.b16 %v963
    %v1000 = vunpack.c.l.b16 %v964
    %v1001 = vunpack.c.l.b16 %v965
    %v1002 = vunpack.c.l.b16 %v966
    %v1003 = vunpack.c.l.b16 %v967
    %v1004 = vunpack.c.l.b16 %v968
    %v1005 = vunpack.c.l.b16 %v969
    %v1006 = vunpack.c.l.b16 %v970
    %v1007 = vunpack.c.l.b16 %v971
    %v1008 = vunpack.c.l.b16 %v972
    %v1009 = vunpack.c.l.b16 %v973
    %v1010 = vunpack.c.l.b16 %v974
    %v1011 = vunpack.c.l.b16 %v975
    %v1012 = vunpack.c.l.b16 %v976
    %v1013 = vpack.c.b16 %v998, %v997
    %v1014 = vpack.c.b16 %v1000, %v999
    %v1015 = vpack.c.b16 %v1002, %v1001
    %v1016 = vpack.c.b16 %v1004, %v1003
    %v1017 = vpack.c.b16 %v1006, %v1005
    %v1018 = vpack.c.b16 %v1008, %v1007
    %v1019 = vpack.c.b16 %v1010, %v1009
    %v1020 = vpack.c.b16 %v1012, %v1011
    %1029 = vmatpush.bf16.msra.mxu0 %v1020
    %1030 = vmatpush.bf16.msra.mxu0 %v1019
    %1031 = vmatpush.bf16.msra.mxu0 %v1018
    %1032 = vmatpush.bf16.msra.mxu0 %v1017
    %1033 = vmatpush.bf16.msra.mxu0 %v1016
    %1034 = vmatpush.bf16.msra.mxu0 %v1015
    %1035 = vmatpush.bf16.msra.mxu0 %v1014
    %1036 = vmatpush.bf16.msra.mxu0 %v1013
    %1037 = vmatmul.bf16.gmra.mxu0 %v960
    %v1038 = vpop.f32.mrf.mxu0
    %v1039 = vadd.f32 %v979, %v1038
    %v1040 = vpop.f32.mrf.mxu0
    %v1041 = vadd.f32 %v979, %v1040
    %1042 = vdwg.mxu0
    %v1043 = vadd.f32 %v822, %v1039
    %v1044 = vadd.f32 %v823, %v1041
    %s1045 = scalar_lea.vmem %s4, 1
    %v1046 = vld [vmem:[%s1045] sm:$0x1]
    %s1047 = scalar_lea.vmem [#allocation5], 1
    %v1048 = vld [vmem:[%s1047] sm:$0x1]
    %v1049 = vsel %vm119, %v1043, 0.0
    %1050 = vadd.xlane.f32.xlu0 %v1049
    %v1051 = vpop.xlane.xlu0 %1050
    %v1052 = vsel %vm119, %v1044, 0.0
    %1053 = vadd.xlane.f32.xlu0 %v1052
    %v1054 = vpop.xlane.xlu0 %1053
    %v1055 = vmul.f32 %v1051, %v132
    %v1056 = vmul.f32 %v1054, %v132
    %v1057 = vsub.f32 %v1043, %v1055
    %v1058 = vsub.f32 %v1044, %v1056
    %v1059 = vmul.f32 %v1057, %v1057
    %v1060 = vmul.f32 %v1058, %v1058
    %v1061 = vsel %vm119, %v1059, 0.0
    %1062 = vadd.xlane.f32.xlu0 %v1061
    %v1063 = vpop.xlane.xlu0 %1062
    %v1064 = vsel %vm119, %v1060, 0.0
    %1065 = vadd.xlane.f32.xlu0 %v1064
    %v1066 = vpop.xlane.xlu0 %1065
    %v1067 = vmul.f32 %v1063, %v132
    %v1068 = vmul.f32 %v1066, %v132
    %v1069 = vadd.f32 %v1067, 1e-05
    %v1070 = vadd.f32 %v1068, 1e-05
    %v1071 = vrsqrt.pop %v1069
    %v1072 = vmul.f32 %v1071, %v1069
    %v1073 = vmul.f32 %v1072, %v1071
    %v1074 = vmul.f32 0.5, %v1073
    %v1075 = vsub.f32 1.5, %v1074
    %v1076 = vmul.f32 %v1071, %v1075
    %vm1077 = vweird.f32 %v1069
    %vm1078 = vweird.f32 %v1071
    %vm1079 = vmor %vm1077, %vm1078
    %v1080 = vsel %vm1079, %v1071, %v1076
    %v1081 = vrsqrt.pop %v1070
    %v1082 = vmul.f32 %v1081, %v1070
    %v1083 = vmul.f32 %v1082, %v1081
    %v1084 = vmul.f32 0.5, %v1083
    %v1085 = vsub.f32 1.5, %v1084
    %v1086 = vmul.f32 %v1081, %v1085
    %vm1087 = vweird.f32 %v1070
    %vm1088 = vweird.f32 %v1081
    %vm1089 = vmor %vm1087, %vm1088
    %v1090 = vsel %vm1089, %v1081, %v1086
    %v1091 = vmul.f32 %v1057, %v1080
    %v1092 = vmul.f32 %v1058, %v1090
    %v1094 = vperm.slane %v1046, 0
    %v1096 = vmul.f32 %v1091, %v1094
    %v1097 = vmul.f32 %v1092, %v1094
    %v1099 = vperm.slane %v1048, 0
    %v1101 = vadd.f32 %v1096, %v1099
    %v1102 = vadd.f32 %v1097, %v1099
    %v1103 = vpack.c.bf16 %v1102, %v1101
    %s1104 = scalar_lea.vmem %s6, 16
    %v1105 = vld [vmem:[%s1104] sm:$0xf]
    %v1106 = vld [vmem:[%s1104 + $0x4] sm:$0xf]
    %v1107 = vld [vmem:[%s1104 + $0x8] sm:$0xf]
    %v1108 = vld [vmem:[%s1104 + $0xc] sm:$0xf]
    %s1109 = scalar_lea.vmem %s7, 1
    %v1110 = vld [vmem:[%s1109] sm:$0x1]
    %v1112 = vperm.slane %v1110, 0
    %v1118 = vunpack.c.l.b16 %v1105
    %v1119 = vunpack.c.l.b16 %v1106
    %v1120 = vunpack.c.l.b16 %v1107
    %v1121 = vunpack.c.l.b16 %v1108
    %v1122 = vpack.c.b16 %v1119, %v1118
    %v1123 = vpack.c.b16 %v1121, %v1120
    %v1127 = vsel %vm119, %v1103, 0
    %1129 = vmatpush.bf16.msra.mxu0 0
    %1130 = vmatpush.bf16.msra.mxu0 0
    %1131 = vmatpush.bf16.msra.mxu0 0
    %1132 = vmatpush.bf16.msra.mxu0 0
    %1133 = vmatpush.bf16.msra.mxu0 0
    %1134 = vmatpush.bf16.msra.mxu0 0
    %1135 = vmatpush.bf16.msra.mxu0 %v1123
    %1136 = vmatpush.bf16.msra.mxu0 %v1122
    %1137 = vmatmul.bf16.gmra.mxu0 %v1127
    %v1138 = vpop.f32.mrf.mxu0
    %v1139 = vadd.f32 %v1112, %v1138
    %v1140 = vpop.f32.mrf.mxu0
    %v1141 = vadd.f32 %v1112, %v1140
    %1142 = vdwg.mxu0
    %s1143 = scalar_lea.vmem %s8, 16
    %v1144 = vld [vmem:[%s1143] sm:$0xf]
    %v1145 = vld [vmem:[%s1143 + $0x4] sm:$0xf]
    %v1146 = vld [vmem:[%s1143 + $0x8] sm:$0xf]
    %v1147 = vld [vmem:[%s1143 + $0xc] sm:$0xf]
    %1150 = vrot.lane.b32.xlu0 %v1139, 96
    %v1151 = vpop.permute.xlu0 %1150
    %1152 = vrot.lane.b32.xlu0 %v1141, 96
    %v1153 = vpop.permute.xlu0 %1152
    %v1154 = vsel %vm229, %v1139, 0
    %v1156 = vsel %vm229, %v1141, 0
    %v1158 = vsel %vm229, %v1151, 0
    %v1160 = vsel %vm229, %v1153, 0
    %1162 = vmatpush.xpose.msra.mxu0 0.0
    %1163 = vmatpush.xpose.msra.mxu0 0.0
    %1164 = vmatpush.xpose.msra.mxu0 0.0
    %1165 = vmatpush.xpose.msra.mxu0 0.0
    %1166 = vmatpush.xpose.msra.mxu0 0.0
    %1167 = vmatpush.xpose.msra.mxu0 0.0
    %1168 = vmatpush.xpose.msra.mxu0 0.0
    %1169 = vmatpush.xpose.msra.mxu0 0.0
    %1170 = vmatpush.xpose.msra.mxu0 0.0
    %1171 = vmatpush.xpose.msra.mxu0 0.0
    %1172 = vmatpush.xpose.msra.mxu0 0.0
    %1173 = vmatpush.xpose.msra.mxu0 0.0
    %1174 = vmatpush.xpose.msra.mxu0 0.0
    %1175 = vmatpush.xpose.msra.mxu0 0.0
    %1176 = vmatpush.xpose.msra.mxu0 %v1160
    %1177 = vmatpush.xpose.msra.mxu0 %v1158
    %1178 = vmatmul.f32.gmra.mxu0 %v1154
    %v1179 = vpop.f32.mrf.mxu0
    %v1180 = vadd.f32 0.0, %v1179
    %1181 = vmatmul.f32.gmra.mxu0 %v1156
    %v1182 = vpop.f32.mrf.mxu0
    %v1183 = vadd.f32 0.0, %v1182
    %1184 = vdwg.mxu0
    %v1185 = vmul.f32 %v1180, 0.35355338
    %v1186 = vmul.f32 %v1183, 0.35355338
    %v1187 = vadd.f32 %v1185, %v115
    %v1188 = vadd.f32 %v1186, %v116
    %v1189 = vsel %vm265, %v1187, -inf
    %1190 = vmax.xlane.f32.xlu0 %v1189
    %v1191 = vpop.xlane.xlu0 %1190
    %v1192 = vsel %vm265, %v1188, -inf
    %1193 = vmax.xlane.f32.xlu0 %v1192
    %v1194 = vpop.xlane.xlu0 %1193
    %v1195 = vsub.f32 %v1187, %v1191
    %v1196 = vsub.f32 %v1188, %v1194
    %v1197 = vmul.f32 %v1195, 1.442695
    %v1198 = vpow.pop %v1197
    %v1199 = vmul.f32 %v1196, 1.442695
    %v1200 = vpow.pop %v1199
    %v1201 = vsel %vm265, %v1198, 0.0
    %1202 = vadd.xlane.f32.xlu0 %v1201
    %v1203 = vpop.xlane.xlu0 %1202
    %v1204 = vsel %vm265, %v1200, 0.0
    %1205 = vadd.xlane.f32.xlu0 %v1204
    %v1206 = vpop.xlane.xlu0 %1205
    %v1207 = vrcp.pop %v1203
    %v1208 = vmul.f32 %v1203, %v1207
    %v1209 = vsub.f32 1.0, %v1208
    %v1210 = vmul.f32 %v1207, %v1209
    %v1211 = vadd.f32 %v1207, %v1210
    %vm1212 = vweird.f32 %v1203
    %vm1213 = vweird.f32 %v1207
    %vm1214 = vmor %vm1212, %vm1213
    %v1215 = vsel %vm1214, %v1207, %v1211
    %v1216 = vand.u32 2147483647, %v1203
    %vm1217 = vcmp.eq.f32.partialorder %v1216, 8.507059e+37
    %v1218 = vand.u32 %v1203, 2147483648
    %v1219 = vor.u32 1.1754944e-38, %v1218
    %v1220 = vsel %vm1217, %v1219, %v1215
    %v1221 = vmul.f32 %v1198, %v1220
    %v1222 = vrcp.pop %v1206
    %v1223 = vmul.f32 %v1206, %v1222
    %v1224 = vsub.f32 1.0, %v1223
    %v1225 = vmul.f32 %v1222, %v1224
    %v1226 = vadd.f32 %v1222, %v1225
    %vm1227 = vweird.f32 %v1206
    %vm1228 = vweird.f32 %v1222
    %vm1229 = vmor %vm1227, %vm1228
    %v1230 = vsel %vm1229, %v1222, %v1226
    %v1231 = vand.u32 2147483647, %v1206
    %vm1232 = vcmp.eq.f32.partialorder %v1231, 8.507059e+37
    %v1233 = vand.u32 %v1206, 2147483648
    %v1234 = vor.u32 1.1754944e-38, %v1233
    %v1235 = vsel %vm1232, %v1234, %v1230
    %v1236 = vmul.f32 %v1200, %v1235
    %1237 = vrot.lane.b32.xlu0 %v1139, 64
    %v1238 = vpop.permute.xlu0 %1237
    %1239 = vrot.lane.b32.xlu0 %v1141, 64
    %v1240 = vpop.permute.xlu0 %1239
    %v1244 = vsel %vm265, %v1221, 0
    %v1247 = vsel %vm265, %v1236, 0
    %1249 = vmatpush.msra.mxu0 0.0
    %1250 = vmatpush.msra.mxu0 0.0
    %1251 = vmatpush.msra.mxu0 0.0
    %1252 = vmatpush.msra.mxu0 0.0
    %1253 = vmatpush.msra.mxu0 0.0
    %1254 = vmatpush.msra.mxu0 0.0
    %1255 = vmatpush.msra.mxu0 0.0
    %1256 = vmatpush.msra.mxu0 0.0
    %1257 = vmatpush.msra.mxu0 0.0
    %1258 = vmatpush.msra.mxu0 0.0
    %1259 = vmatpush.msra.mxu0 0.0
    %1260 = vmatpush.msra.mxu0 0.0
    %1261 = vmatpush.msra.mxu0 0.0
    %1262 = vmatpush.msra.mxu0 0.0
    %1263 = vmatpush.msra.mxu0 %v1240
    %1264 = vmatpush.msra.mxu0 %v1238
    %1265 = vmatmul.f32.gmra.mxu0 %v1244
    %v1266 = vpop.f32.mrf.mxu0
    %v1267 = vadd.f32 0.0, %v1266
    %1268 = vmatmul.f32.gmra.mxu0 %v1247
    %v1269 = vpop.f32.mrf.mxu0
    %v1270 = vadd.f32 0.0, %v1269
    %1271 = vdwg.mxu0
    %v1272 = vpack.c.bf16 %v1270, %v1267
    %1273 = vrot.lane.b32.xlu0 %v1139, 120
    %v1274 = vpop.permute.xlu0 %1273
    %1275 = vrot.lane.b32.xlu0 %v1141, 120
    %v1276 = vpop.permute.xlu0 %1275
    %1277 = vrot.lane.b32.xlu0 %v1139, 88
    %v1278 = vpop.permute.xlu0 %1277
    %1279 = vrot.lane.b32.xlu0 %v1141, 88
    %v1280 = vpop.permute.xlu0 %1279
    %v1281 = vsel %vm229, %v1274, 0
    %v1283 = vsel %vm229, %v1276, 0
    %v1285 = vsel %vm229, %v1278, 0
    %v1287 = vsel %vm229, %v1280, 0
    %1289 = vmatpush.xpose.msra.mxu0 0.0
    %1290 = vmatpush.xpose.msra.mxu0 0.0
    %1291 = vmatpush.xpose.msra.mxu0 0.0
    %1292 = vmatpush.xpose.msra.mxu0 0.0
    %1293 = vmatpush.xpose.msra.mxu0 0.0
    %1294 = vmatpush.xpose.msra.mxu0 0.0
    %1295 = vmatpush.xpose.msra.mxu0 0.0
    %1296 = vmatpush.xpose.msra.mxu0 0.0
    %1297 = vmatpush.xpose.msra.mxu0 0.0
    %1298 = vmatpush.xpose.msra.mxu0 0.0
    %1299 = vmatpush.xpose.msra.mxu0 0.0
    %1300 = vmatpush.xpose.msra.mxu0 0.0
    %1301 = vmatpush.xpose.msra.mxu0 0.0
    %1302 = vmatpush.xpose.msra.mxu0 0.0
    %1303 = vmatpush.xpose.msra.mxu0 %v1287
    %1304 = vmatpush.xpose.msra.mxu0 %v1285
    %1305 = vmatmul.f32.gmra.mxu0 %v1281
    %v1306 = vpop.f32.mrf.mxu0
    %v1307 = vadd.f32 0.0, %v1306
    %1308 = vmatmul.f32.gmra.mxu0 %v1283
    %v1309 = vpop.f32.mrf.mxu0
    %v1310 = vadd.f32 0.0, %v1309
    %1311 = vdwg.mxu0
    %v1312 = vmul.f32 %v1307, 0.35355338
    %v1313 = vmul.f32 %v1310, 0.35355338
    %v1314 = vadd.f32 %v1312, %v115
    %v1315 = vadd.f32 %v1313, %v116
    %v1316 = vsel %vm265, %v1314, -inf
    %1317 = vmax.xlane.f32.xlu0 %v1316
    %v1318 = vpop.xlane.xlu0 %1317
    %v1319 = vsel %vm265, %v1315, -inf
    %1320 = vmax.xlane.f32.xlu0 %v1319
    %v1321 = vpop.xlane.xlu0 %1320
    %v1322 = vsub.f32 %v1314, %v1318
    %v1323 = vsub.f32 %v1315, %v1321
    %v1324 = vmul.f32 %v1322, 1.442695
    %v1325 = vpow.pop %v1324
    %v1326 = vmul.f32 %v1323, 1.442695
    %v1327 = vpow.pop %v1326
    %v1328 = vsel %vm265, %v1325, 0.0
    %1329 = vadd.xlane.f32.xlu0 %v1328
    %v1330 = vpop.xlane.xlu0 %1329
    %v1331 = vsel %vm265, %v1327, 0.0
    %1332 = vadd.xlane.f32.xlu0 %v1331
    %v1333 = vpop.xlane.xlu0 %1332
    %v1334 = vrcp.pop %v1330
    %v1335 = vmul.f32 %v1330, %v1334
    %v1336 = vsub.f32 1.0, %v1335
    %v1337 = vmul.f32 %v1334, %v1336
    %v1338 = vadd.f32 %v1334, %v1337
    %vm1339 = vweird.f32 %v1330
    %vm1340 = vweird.f32 %v1334
    %vm1341 = vmor %vm1339, %vm1340
    %v1342 = vsel %vm1341, %v1334, %v1338
    %v1343 = vand.u32 2147483647, %v1330
    %vm1344 = vcmp.eq.f32.partialorder %v1343, 8.507059e+37
    %v1345 = vand.u32 %v1330, 2147483648
    %v1346 = vor.u32 1.1754944e-38, %v1345
    %v1347 = vsel %vm1344, %v1346, %v1342
    %v1348 = vmul.f32 %v1325, %v1347
    %v1349 = vrcp.pop %v1333
    %v1350 = vmul.f32 %v1333, %v1349
    %v1351 = vsub.f32 1.0, %v1350
    %v1352 = vmul.f32 %v1349, %v1351
    %v1353 = vadd.f32 %v1349, %v1352
    %vm1354 = vweird.f32 %v1333
    %vm1355 = vweird.f32 %v1349
    %vm1356 = vmor %vm1354, %vm1355
    %v1357 = vsel %vm1356, %v1349, %v1353
    %v1358 = vand.u32 2147483647, %v1333
    %vm1359 = vcmp.eq.f32.partialorder %v1358, 8.507059e+37
    %v1360 = vand.u32 %v1333, 2147483648
    %v1361 = vor.u32 1.1754944e-38, %v1360
    %v1362 = vsel %vm1359, %v1361, %v1357
    %v1363 = vmul.f32 %v1327, %v1362
    %1364 = vrot.lane.b32.xlu0 %v1139, 56
    %v1365 = vpop.permute.xlu0 %1364
    %1366 = vrot.lane.b32.xlu0 %v1141, 56
    %v1367 = vpop.permute.xlu0 %1366
    %v1371 = vsel %vm265, %v1348, 0
    %v1374 = vsel %vm265, %v1363, 0
    %1376 = vmatpush.msra.mxu0 0.0
    %1377 = vmatpush.msra.mxu0 0.0
    %1378 = vmatpush.msra.mxu0 0.0
    %1379 = vmatpush.msra.mxu0 0.0
    %1380 = vmatpush.msra.mxu0 0.0
    %1381 = vmatpush.msra.mxu0 0.0
    %1382 = vmatpush.msra.mxu0 0.0
    %1383 = vmatpush.msra.mxu0 0.0
    %1384 = vmatpush.msra.mxu0 0.0
    %1385 = vmatpush.msra.mxu0 0.0
    %1386 = vmatpush.msra.mxu0 0.0
    %1387 = vmatpush.msra.mxu0 0.0
    %1388 = vmatpush.msra.mxu0 0.0
    %1389 = vmatpush.msra.mxu0 0.0
    %1390 = vmatpush.msra.mxu0 %v1367
    %1391 = vmatpush.msra.mxu0 %v1365
    %1392 = vmatmul.f32.gmra.mxu0 %v1371
    %v1393 = vpop.f32.mrf.mxu0
    %v1394 = vadd.f32 0.0, %v1393
    %1395 = vmatmul.f32.gmra.mxu0 %v1374
    %v1396 = vpop.f32.mrf.mxu0
    %v1397 = vadd.f32 0.0, %v1396
    %1398 = vdwg.mxu0
    %v1399 = vpack.c.bf16 %v1397, %v1394
    %v1401 = vsel %vm229, %v1399, 0
    %v1404 = vsel %vm480, %v1145, 0
    %1406 = vmatpush.bf16.msra.mxu0 0
    %1407 = vmatpush.bf16.msra.mxu0 0
    %1408 = vmatpush.bf16.msra.mxu0 0
    %1409 = vmatpush.bf16.msra.mxu0 0
    %1410 = vmatpush.bf16.msra.mxu0 0
    %1411 = vmatpush.bf16.msra.mxu0 0
    %1412 = vmatpush.bf16.msra.mxu0 0
    %1413 = vmatpush.bf16.msra.mxu0 %v1404
    %1414 = vmatmul.bf16.gmra.mxu0 %v1401
    %v1415 = vpop.f32.mrf.mxu0
    %v1416 = vadd.f32 0.0, %v1415
    %v1417 = vpop.f32.mrf.mxu0
    %v1418 = vadd.f32 0.0, %v1417
    %1419 = vdwg.mxu0
    %v1421 = vsel %vm229, %v1272, 0
    %v1424 = vsel %vm480, %v1144, 0
    %1426 = vmatpush.bf16.msra.mxu0 0
    %1427 = vmatpush.bf16.msra.mxu0 0
    %1428 = vmatpush.bf16.msra.mxu0 0
    %1429 = vmatpush.bf16.msra.mxu0 0
    %1430 = vmatpush.bf16.msra.mxu0 0
    %1431 = vmatpush.bf16.msra.mxu0 0
    %1432 = vmatpush.bf16.msra.mxu0 0
    %1433 = vmatpush.bf16.msra.mxu0 %v1424
    %1434 = vmatmul.bf16.gmra.mxu0 %v1421
    %v1435 = vpop.f32.mrf.mxu0
    %v1436 = vadd.f32 %v1416, %v1435
    %v1437 = vpop.f32.mrf.mxu0
    %v1438 = vadd.f32 %v1418, %v1437
    %1439 = vdwg.mxu0
    %1440 = vrot.lane.b32.xlu0 %v1139, 112
    %v1441 = vpop.permute.xlu0 %1440
    %1442 = vrot.lane.b32.xlu0 %v1141, 112
    %v1443 = vpop.permute.xlu0 %1442
    %1444 = vrot.lane.b32.xlu0 %v1139, 80
    %v1445 = vpop.permute.xlu0 %1444
    %1446 = vrot.lane.b32.xlu0 %v1141, 80
    %v1447 = vpop.permute.xlu0 %1446
    %v1448 = vsel %vm229, %v1441, 0
    %v1450 = vsel %vm229, %v1443, 0
    %v1452 = vsel %vm229, %v1445, 0
    %v1454 = vsel %vm229, %v1447, 0
    %1456 = vmatpush.xpose.msra.mxu0 0.0
    %1457 = vmatpush.xpose.msra.mxu0 0.0
    %1458 = vmatpush.xpose.msra.mxu0 0.0
    %1459 = vmatpush.xpose.msra.mxu0 0.0
    %1460 = vmatpush.xpose.msra.mxu0 0.0
    %1461 = vmatpush.xpose.msra.mxu0 0.0
    %1462 = vmatpush.xpose.msra.mxu0 0.0
    %1463 = vmatpush.xpose.msra.mxu0 0.0
    %1464 = vmatpush.xpose.msra.mxu0 0.0
    %1465 = vmatpush.xpose.msra.mxu0 0.0
    %1466 = vmatpush.xpose.msra.mxu0 0.0
    %1467 = vmatpush.xpose.msra.mxu0 0.0
    %1468 = vmatpush.xpose.msra.mxu0 0.0
    %1469 = vmatpush.xpose.msra.mxu0 0.0
    %1470 = vmatpush.xpose.msra.mxu0 %v1454
    %1471 = vmatpush.xpose.msra.mxu0 %v1452
    %1472 = vmatmul.f32.gmra.mxu0 %v1448
    %v1473 = vpop.f32.mrf.mxu0
    %v1474 = vadd.f32 0.0, %v1473
    %1475 = vmatmul.f32.gmra.mxu0 %v1450
    %v1476 = vpop.f32.mrf.mxu0
    %v1477 = vadd.f32 0.0, %v1476
    %1478 = vdwg.mxu0
    %v1479 = vmul.f32 %v1474, 0.35355338
    %v1480 = vmul.f32 %v1477, 0.35355338
    %v1481 = vadd.f32 %v1479, %v115
    %v1482 = vadd.f32 %v1480, %v116
    %v1483 = vsel %vm265, %v1481, -inf
    %1484 = vmax.xlane.f32.xlu0 %v1483
    %v1485 = vpop.xlane.xlu0 %1484
    %v1486 = vsel %vm265, %v1482, -inf
    %1487 = vmax.xlane.f32.xlu0 %v1486
    %v1488 = vpop.xlane.xlu0 %1487
    %v1489 = vsub.f32 %v1481, %v1485
    %v1490 = vsub.f32 %v1482, %v1488
    %v1491 = vmul.f32 %v1489, 1.442695
    %v1492 = vpow.pop %v1491
    %v1493 = vmul.f32 %v1490, 1.442695
    %v1494 = vpow.pop %v1493
    %v1495 = vsel %vm265, %v1492, 0.0
    %1496 = vadd.xlane.f32.xlu0 %v1495
    %v1497 = vpop.xlane.xlu0 %1496
    %v1498 = vsel %vm265, %v1494, 0.0
    %1499 = vadd.xlane.f32.xlu0 %v1498
    %v1500 = vpop.xlane.xlu0 %1499
    %v1501 = vrcp.pop %v1497
    %v1502 = vmul.f32 %v1497, %v1501
    %v1503 = vsub.f32 1.0, %v1502
    %v1504 = vmul.f32 %v1501, %v1503
    %v1505 = vadd.f32 %v1501, %v1504
    %vm1506 = vweird.f32 %v1497
    %vm1507 = vweird.f32 %v1501
    %vm1508 = vmor %vm1506, %vm1507
    %v1509 = vsel %vm1508, %v1501, %v1505
    %v1510 = vand.u32 2147483647, %v1497
    %vm1511 = vcmp.eq.f32.partialorder %v1510, 8.507059e+37
    %v1512 = vand.u32 %v1497, 2147483648
    %v1513 = vor.u32 1.1754944e-38, %v1512
    %v1514 = vsel %vm1511, %v1513, %v1509
    %v1515 = vmul.f32 %v1492, %v1514
    %v1516 = vrcp.pop %v1500
    %v1517 = vmul.f32 %v1500, %v1516
    %v1518 = vsub.f32 1.0, %v1517
    %v1519 = vmul.f32 %v1516, %v1518
    %v1520 = vadd.f32 %v1516, %v1519
    %vm1521 = vweird.f32 %v1500
    %vm1522 = vweird.f32 %v1516
    %vm1523 = vmor %vm1521, %vm1522
    %v1524 = vsel %vm1523, %v1516, %v1520
    %v1525 = vand.u32 2147483647, %v1500
    %vm1526 = vcmp.eq.f32.partialorder %v1525, 8.507059e+37
    %v1527 = vand.u32 %v1500, 2147483648
    %v1528 = vor.u32 1.1754944e-38, %v1527
    %v1529 = vsel %vm1526, %v1528, %v1524
    %v1530 = vmul.f32 %v1494, %v1529
    %1531 = vrot.lane.b32.xlu0 %v1139, 48
    %v1532 = vpop.permute.xlu0 %1531
    %1533 = vrot.lane.b32.xlu0 %v1141, 48
    %v1534 = vpop.permute.xlu0 %1533
    %v1538 = vsel %vm265, %v1515, 0
    %v1541 = vsel %vm265, %v1530, 0
    %1543 = vmatpush.msra.mxu0 0.0
    %1544 = vmatpush.msra.mxu0 0.0
    %1545 = vmatpush.msra.mxu0 0.0
    %1546 = vmatpush.msra.mxu0 0.0
    %1547 = vmatpush.msra.mxu0 0.0
    %1548 = vmatpush.msra.mxu0 0.0
    %1549 = vmatpush.msra.mxu0 0.0
    %1550 = vmatpush.msra.mxu0 0.0
    %1551 = vmatpush.msra.mxu0 0.0
    %1552 = vmatpush.msra.mxu0 0.0
    %1553 = vmatpush.msra.mxu0 0.0
    %1554 = vmatpush.msra.mxu0 0.0
    %1555 = vmatpush.msra.mxu0 0.0
    %1556 = vmatpush.msra.mxu0 0.0
    %1557 = vmatpush.msra.mxu0 %v1534
    %1558 = vmatpush.msra.mxu0 %v1532
    %1559 = vmatmul.f32.gmra.mxu0 %v1538
    %v1560 = vpop.f32.mrf.mxu0
    %v1561 = vadd.f32 0.0, %v1560
    %1562 = vmatmul.f32.gmra.mxu0 %v1541
    %v1563 = vpop.f32.mrf.mxu0
    %v1564 = vadd.f32 0.0, %v1563
    %1565 = vdwg.mxu0
    %v1566 = vpack.c.bf16 %v1564, %v1561
    %v1568 = vsel %vm229, %v1566, 0
    %v1571 = vsel %vm480, %v1146, 0
    %1573 = vmatpush.bf16.msra.mxu0 0
    %1574 = vmatpush.bf16.msra.mxu0 0
    %1575 = vmatpush.bf16.msra.mxu0 0
    %1576 = vmatpush.bf16.msra.mxu0 0
    %1577 = vmatpush.bf16.msra.mxu0 0
    %1578 = vmatpush.bf16.msra.mxu0 0
    %1579 = vmatpush.bf16.msra.mxu0 0
    %1580 = vmatpush.bf16.msra.mxu0 %v1571
    %1581 = vmatmul.bf16.gmra.mxu0 %v1568
    %v1582 = vpop.f32.mrf.mxu0
    %v1583 = vadd.f32 0.0, %v1582
    %v1584 = vpop.f32.mrf.mxu0
    %v1585 = vadd.f32 0.0, %v1584
    %1586 = vdwg.mxu0
    %v1587 = vadd.f32 %v1436, %v1583
    %v1588 = vadd.f32 %v1438, %v1585
    %1589 = vrot.lane.b32.xlu0 %v1139, 104
    %v1590 = vpop.permute.xlu0 %1589
    %1591 = vrot.lane.b32.xlu0 %v1141, 104
    %v1592 = vpop.permute.xlu0 %1591
    %1593 = vrot.lane.b32.xlu0 %v1139, 72
    %v1594 = vpop.permute.xlu0 %1593
    %1595 = vrot.lane.b32.xlu0 %v1141, 72
    %v1596 = vpop.permute.xlu0 %1595
    %v1597 = vsel %vm229, %v1590, 0
    %v1599 = vsel %vm229, %v1592, 0
    %v1601 = vsel %vm229, %v1594, 0
    %v1603 = vsel %vm229, %v1596, 0
    %1605 = vmatpush.xpose.msra.mxu0 0.0
    %1606 = vmatpush.xpose.msra.mxu0 0.0
    %1607 = vmatpush.xpose.msra.mxu0 0.0
    %1608 = vmatpush.xpose.msra.mxu0 0.0
    %1609 = vmatpush.xpose.msra.mxu0 0.0
    %1610 = vmatpush.xpose.msra.mxu0 0.0
    %1611 = vmatpush.xpose.msra.mxu0 0.0
    %1612 = vmatpush.xpose.msra.mxu0 0.0
    %1613 = vmatpush.xpose.msra.mxu0 0.0
    %1614 = vmatpush.xpose.msra.mxu0 0.0
    %1615 = vmatpush.xpose.msra.mxu0 0.0
    %1616 = vmatpush.xpose.msra.mxu0 0.0
    %1617 = vmatpush.xpose.msra.mxu0 0.0
    %1618 = vmatpush.xpose.msra.mxu0 0.0
    %1619 = vmatpush.xpose.msra.mxu0 %v1603
    %1620 = vmatpush.xpose.msra.mxu0 %v1601
    %1621 = vmatmul.f32.gmra.mxu0 %v1597
    %v1622 = vpop.f32.mrf.mxu0
    %v1623 = vadd.f32 0.0, %v1622
    %1624 = vmatmul.f32.gmra.mxu0 %v1599
    %v1625 = vpop.f32.mrf.mxu0
    %v1626 = vadd.f32 0.0, %v1625
    %1627 = vdwg.mxu0
    %v1628 = vmul.f32 %v1623, 0.35355338
    %v1629 = vmul.f32 %v1626, 0.35355338
    %v1630 = vadd.f32 %v1628, %v115
    %v1631 = vadd.f32 %v1629, %v116
    %v1632 = vsel %vm265, %v1630, -inf
    %1633 = vmax.xlane.f32.xlu0 %v1632
    %v1634 = vpop.xlane.xlu0 %1633
    %v1635 = vsel %vm265, %v1631, -inf
    %1636 = vmax.xlane.f32.xlu0 %v1635
    %v1637 = vpop.xlane.xlu0 %1636
    %v1638 = vsub.f32 %v1630, %v1634
    %v1639 = vsub.f32 %v1631, %v1637
    %v1640 = vmul.f32 %v1638, 1.442695
    %v1641 = vpow.pop %v1640
    %v1642 = vmul.f32 %v1639, 1.442695
    %v1643 = vpow.pop %v1642
    %v1644 = vsel %vm265, %v1641, 0.0
    %1645 = vadd.xlane.f32.xlu0 %v1644
    %v1646 = vpop.xlane.xlu0 %1645
    %v1647 = vsel %vm265, %v1643, 0.0
    %1648 = vadd.xlane.f32.xlu0 %v1647
    %v1649 = vpop.xlane.xlu0 %1648
    %v1650 = vrcp.pop %v1646
    %v1651 = vmul.f32 %v1646, %v1650
    %v1652 = vsub.f32 1.0, %v1651
    %v1653 = vmul.f32 %v1650, %v1652
    %v1654 = vadd.f32 %v1650, %v1653
    %vm1655 = vweird.f32 %v1646
    %vm1656 = vweird.f32 %v1650
    %vm1657 = vmor %vm1655, %vm1656
    %v1658 = vsel %vm1657, %v1650, %v1654
    %v1659 = vand.u32 2147483647, %v1646
    %vm1660 = vcmp.eq.f32.partialorder %v1659, 8.507059e+37
    %v1661 = vand.u32 %v1646, 2147483648
    %v1662 = vor.u32 1.1754944e-38, %v1661
    %v1663 = vsel %vm1660, %v1662, %v1658
    %v1664 = vmul.f32 %v1641, %v1663
    %v1665 = vrcp.pop %v1649
    %v1666 = vmul.f32 %v1649, %v1665
    %v1667 = vsub.f32 1.0, %v1666
    %v1668 = vmul.f32 %v1665, %v1667
    %v1669 = vadd.f32 %v1665, %v1668
    %vm1670 = vweird.f32 %v1649
    %vm1671 = vweird.f32 %v1665
    %vm1672 = vmor %vm1670, %vm1671
    %v1673 = vsel %vm1672, %v1665, %v1669
    %v1674 = vand.u32 2147483647, %v1649
    %vm1675 = vcmp.eq.f32.partialorder %v1674, 8.507059e+37
    %v1676 = vand.u32 %v1649, 2147483648
    %v1677 = vor.u32 1.1754944e-38, %v1676
    %v1678 = vsel %vm1675, %v1677, %v1673
    %v1679 = vmul.f32 %v1643, %v1678
    %1680 = vrot.lane.b32.xlu0 %v1139, 40
    %v1681 = vpop.permute.xlu0 %1680
    %1682 = vrot.lane.b32.xlu0 %v1141, 40
    %v1683 = vpop.permute.xlu0 %1682
    %v1687 = vsel %vm265, %v1664, 0
    %v1690 = vsel %vm265, %v1679, 0
    %1692 = vmatpush.msra.mxu0 0.0
    %1693 = vmatpush.msra.mxu0 0.0
    %1694 = vmatpush.msra.mxu0 0.0
    %1695 = vmatpush.msra.mxu0 0.0
    %1696 = vmatpush.msra.mxu0 0.0
    %1697 = vmatpush.msra.mxu0 0.0
    %1698 = vmatpush.msra.mxu0 0.0
    %1699 = vmatpush.msra.mxu0 0.0
    %1700 = vmatpush.msra.mxu0 0.0
    %1701 = vmatpush.msra.mxu0 0.0
    %1702 = vmatpush.msra.mxu0 0.0
    %1703 = vmatpush.msra.mxu0 0.0
    %1704 = vmatpush.msra.mxu0 0.0
    %1705 = vmatpush.msra.mxu0 0.0
    %1706 = vmatpush.msra.mxu0 %v1683
    %1707 = vmatpush.msra.mxu0 %v1681
    %1708 = vmatmul.f32.gmra.mxu0 %v1687
    %v1709 = vpop.f32.mrf.mxu0
    %v1710 = vadd.f32 0.0, %v1709
    %1711 = vmatmul.f32.gmra.mxu0 %v1690
    %v1712 = vpop.f32.mrf.mxu0
    %v1713 = vadd.f32 0.0, %v1712
    %1714 = vdwg.mxu0
    %v1715 = vpack.c.bf16 %v1713, %v1710
    %v1717 = vsel %vm229, %v1715, 0
    %v1720 = vsel %vm480, %v1147, 0
    %1722 = vmatpush.bf16.msra.mxu0 0
    %1723 = vmatpush.bf16.msra.mxu0 0
    %1724 = vmatpush.bf16.msra.mxu0 0
    %1725 = vmatpush.bf16.msra.mxu0 0
    %1726 = vmatpush.bf16.msra.mxu0 0
    %1727 = vmatpush.bf16.msra.mxu0 0
    %1728 = vmatpush.bf16.msra.mxu0 0
    %1729 = vmatpush.bf16.msra.mxu0 %v1720
    %1730 = vmatmul.bf16.gmra.mxu0 %v1717
    %v1731 = vpop.f32.mrf.mxu0
    %v1732 = vadd.f32 0.0, %v1731
    %v1733 = vpop.f32.mrf.mxu0
    %v1734 = vadd.f32 0.0, %v1733
    %1735 = vdwg.mxu0
    %v1736 = vadd.f32 %v1587, %v1732
    %v1737 = vadd.f32 %v1588, %v1734
    %v1738 = vadd.f32 %v1043, %v1736
    %v1739 = vadd.f32 %v1044, %v1737
    %s1740 = scalar_lea.vmem %s9, 1
    %v1741 = vld [vmem:[%s1740] sm:$0x1]
    %v1743 = vperm.slane %v1741, 0
    %v1745 = vadd.f32 %v1738, %v1743
    %v1746 = vadd.f32 %v1739, %v1743
    %s1747 = scalar_lea.vmem %s10, 1
    %v1748 = vld [vmem:[%s1747] sm:$0x1]
    %s1749 = scalar_lea.vmem [#allocation7], 1
    %v1750 = vld [vmem:[%s1749] sm:$0x1]
    %v1751 = vsel %vm119, %v1745, 0.0
    %1752 = vadd.xlane.f32.xlu0 %v1751
    %v1753 = vpop.xlane.xlu0 %1752
    %v1754 = vsel %vm119, %v1746, 0.0
    %1755 = vadd.xlane.f32.xlu0 %v1754
    %v1756 = vpop.xlane.xlu0 %1755
    %v1757 = vmul.f32 %v1753, %v132
    %v1758 = vmul.f32 %v1756, %v132
    %v1759 = vsub.f32 %v1745, %v1757
    %v1760 = vsub.f32 %v1746, %v1758
    %v1761 = vmul.f32 %v1759, %v1759
    %v1762 = vmul.f32 %v1760, %v1760
    %v1763 = vsel %vm119, %v1761, 0.0
    %1764 = vadd.xlane.f32.xlu0 %v1763
    %v1765 = vpop.xlane.xlu0 %1764
    %v1766 = vsel %vm119, %v1762, 0.0
    %1767 = vadd.xlane.f32.xlu0 %v1766
    %v1768 = vpop.xlane.xlu0 %1767
    %v1769 = vmul.f32 %v1765, %v132
    %v1770 = vmul.f32 %v1768, %v132
    %v1771 = vadd.f32 %v1769, 1e-05
    %v1772 = vadd.f32 %v1770, 1e-05
    %v1773 = vrsqrt.pop %v1771
    %v1774 = vmul.f32 %v1773, %v1771
    %v1775 = vmul.f32 %v1774, %v1773
    %v1776 = vmul.f32 0.5, %v1775
    %v1777 = vsub.f32 1.5, %v1776
    %v1778 = vmul.f32 %v1773, %v1777
    %vm1779 = vweird.f32 %v1771
    %vm1780 = vweird.f32 %v1773
    %vm1781 = vmor %vm1779, %vm1780
    %v1782 = vsel %vm1781, %v1773, %v1778
    %v1783 = vrsqrt.pop %v1772
    %v1784 = vmul.f32 %v1783, %v1772
    %v1785 = vmul.f32 %v1784, %v1783
    %v1786 = vmul.f32 0.5, %v1785
    %v1787 = vsub.f32 1.5, %v1786
    %v1788 = vmul.f32 %v1783, %v1787
    %vm1789 = vweird.f32 %v1772
    %vm1790 = vweird.f32 %v1783
    %vm1791 = vmor %vm1789, %vm1790
    %v1792 = vsel %vm1791, %v1783, %v1788
    %v1793 = vmul.f32 %v1759, %v1782
    %v1794 = vmul.f32 %v1760, %v1792
    %v1796 = vperm.slane %v1748, 0
    %v1798 = vmul.f32 %v1793, %v1796
    %v1799 = vmul.f32 %v1794, %v1796
    %v1801 = vperm.slane %v1750, 0
    %v1803 = vadd.f32 %v1798, %v1801
    %v1804 = vadd.f32 %v1799, %v1801
    %v1805 = vpack.c.bf16 %v1804, %v1803
    %s1806 = scalar_lea.vmem %s12, 16
    %v1807 = vld [vmem:[%s1806] sm:$0xf]
    %v1808 = vld [vmem:[%s1806 + $0x4] sm:$0xf]
    %v1809 = vld [vmem:[%s1806 + $0x8] sm:$0xf]
    %v1810 = vld [vmem:[%s1806 + $0xc] sm:$0xf]
    %s1811 = scalar_lea.vmem %s13, 1
    %v1812 = vld [vmem:[%s1811] sm:$0x1]
    %v1814 = vperm.slane %v1812, 0
    %v1820 = vunpack.c.l.b16 %v1807
    %v1821 = vunpack.c.l.b16 %v1808
    %v1822 = vunpack.c.l.b16 %v1809
    %v1823 = vunpack.c.l.b16 %v1810
    %v1824 = vpack.c.b16 %v1821, %v1820
    %v1825 = vpack.c.b16 %v1823, %v1822
    %v1829 = vsel %vm119, %v1805, 0
    %1831 = vmatpush.bf16.msra.mxu0 0
    %1832 = vmatpush.bf16.msra.mxu0 0
    %1833 = vmatpush.bf16.msra.mxu0 0
    %1834 = vmatpush.bf16.msra.mxu0 0
    %1835 = vmatpush.bf16.msra.mxu0 0
    %1836 = vmatpush.bf16.msra.mxu0 0
    %1837 = vmatpush.bf16.msra.mxu0 %v1825
    %1838 = vmatpush.bf16.msra.mxu0 %v1824
    %1839 = vmatmul.bf16.gmra.mxu0 %v1829
    %v1840 = vpop.f32.mrf.mxu0
    %v1841 = vadd.f32 %v1814, %v1840
    %v1842 = vpop.f32.mrf.mxu0
    %v1843 = vadd.f32 %v1814, %v1842
    %1844 = vdwg.mxu0
    %v1845 = vmul.f32 %v1841, 1.702
    %v1846 = vmul.f32 %v1843, 1.702
    %v1847 = vxor.u32 %v1845, 2147483648
    %v1848 = vxor.u32 %v1846, 2147483648
    %v1849 = vmul.f32 %v1847, 1.442695
    %v1850 = vpow.pop %v1849
    %v1851 = vmul.f32 %v1848, 1.442695
    %v1852 = vpow.pop %v1851
    %v1853 = vadd.f32 %v1850, 1.0
    %v1854 = vadd.f32 %v1852, 1.0
    %v1855 = vrcp.pop %v1853
    %v1856 = vmul.f32 %v1853, %v1855
    %v1857 = vsub.f32 1.0, %v1856
    %v1858 = vmul.f32 %v1855, %v1857
    %v1859 = vadd.f32 %v1855, %v1858
    %vm1860 = vweird.f32 %v1853
    %vm1861 = vweird.f32 %v1855
    %vm1862 = vmor %vm1860, %vm1861
    %v1863 = vsel %vm1862, %v1855, %v1859
    %v1864 = vand.u32 2147483647, %v1853
    %vm1865 = vcmp.eq.f32.partialorder %v1864, 8.507059e+37
    %v1866 = vand.u32 %v1853, 2147483648
    %v1867 = vor.u32 1.1754944e-38, %v1866
    %v1868 = vsel %vm1865, %v1867, %v1863
    %v1869 = vmul.f32 1.0, %v1868
    %v1870 = vrcp.pop %v1854
    %v1871 = vmul.f32 %v1854, %v1870
    %v1872 = vsub.f32 1.0, %v1871
    %v1873 = vmul.f32 %v1870, %v1872
    %v1874 = vadd.f32 %v1870, %v1873
    %vm1875 = vweird.f32 %v1854
    %vm1876 = vweird.f32 %v1870
    %vm1877 = vmor %vm1875, %vm1876
    %v1878 = vsel %vm1877, %v1870, %v1874
    %v1879 = vand.u32 2147483647, %v1854
    %vm1880 = vcmp.eq.f32.partialorder %v1879, 8.507059e+37
    %v1881 = vand.u32 %v1854, 2147483648
    %v1882 = vor.u32 1.1754944e-38, %v1881
    %v1883 = vsel %vm1880, %v1882, %v1878
    %v1884 = vmul.f32 1.0, %v1883
    %v1885 = vmul.f32 %v1841, %v1869
    %v1886 = vmul.f32 %v1843, %v1884
    %v1887 = vpack.c.bf16 %v1886, %v1885
    %s1888 = scalar_lea.vmem %s14, 64
    %v1889 = vld [vmem:[%s1888] sm:$0xf]
    %v1890 = vld [vmem:[%s1888 + $0x4] sm:$0xf]
    %v1891 = vld [vmem:[%s1888 + $0x8] sm:$0xf]
    %v1892 = vld [vmem:[%s1888 + $0xc] sm:$0xf]
    %v1893 = vld [vmem:[%s1888 + $0x10] sm:$0xf]
    %v1894 = vld [vmem:[%s1888 + $0x14] sm:$0xf]
    %v1895 = vld [vmem:[%s1888 + $0x18] sm:$0xf]
    %v1896 = vld [vmem:[%s1888 + $0x1c] sm:$0xf]
    %v1897 = vld [vmem:[%s1888 + $0x20] sm:$0xf]
    %v1898 = vld [vmem:[%s1888 + $0x24] sm:$0xf]
    %v1899 = vld [vmem:[%s1888 + $0x28] sm:$0xf]
    %v1900 = vld [vmem:[%s1888 + $0x2c] sm:$0xf]
    %v1901 = vld [vmem:[%s1888 + $0x30] sm:$0xf]
    %v1902 = vld [vmem:[%s1888 + $0x34] sm:$0xf]
    %v1903 = vld [vmem:[%s1888 + $0x38] sm:$0xf]
    %v1904 = vld [vmem:[%s1888 + $0x3c] sm:$0xf]
    %s1905 = scalar_lea.vmem %s15, 1
    %v1906 = vld [vmem:[%s1905] sm:$0x1]
    %v1908 = vperm.slane %v1906, 0
    %v1926 = vunpack.c.l.b16 %v1889
    %v1927 = vunpack.c.l.b16 %v1890
    %v1928 = vunpack.c.l.b16 %v1891
    %v1929 = vunpack.c.l.b16 %v1892
    %v1930 = vunpack.c.l.b16 %v1893
    %v1931 = vunpack.c.l.b16 %v1894
    %v1932 = vunpack.c.l.b16 %v1895
    %v1933 = vunpack.c.l.b16 %v1896
    %v1934 = vunpack.c.l.b16 %v1897
    %v1935 = vunpack.c.l.b16 %v1898
    %v1936 = vunpack.c.l.b16 %v1899
    %v1937 = vunpack.c.l.b16 %v1900
    %v1938 = vunpack.c.l.b16 %v1901
    %v1939 = vunpack.c.l.b16 %v1902
    %v1940 = vunpack.c.l.b16 %v1903
    %v1941 = vunpack.c.l.b16 %v1904
    %v1942 = vpack.c.b16 %v1927, %v1926
    %v1943 = vpack.c.b16 %v1929, %v1928
    %v1944 = vpack.c.b16 %v1931, %v1930
    %v1945 = vpack.c.b16 %v1933, %v1932
    %v1946 = vpack.c.b16 %v1935, %v1934
    %v1947 = vpack.c.b16 %v1937, %v1936
    %v1948 = vpack.c.b16 %v1939, %v1938
    %v1949 = vpack.c.b16 %v1941, %v1940
    %1958 = vmatpush.bf16.msra.mxu0 %v1949
    %1959 = vmatpush.bf16.msra.mxu0 %v1948
    %1960 = vmatpush.bf16.msra.mxu0 %v1947
    %1961 = vmatpush.bf16.msra.mxu0 %v1946
    %1962 = vmatpush.bf16.msra.mxu0 %v1945
    %1963 = vmatpush.bf16.msra.mxu0 %v1944
    %1964 = vmatpush.bf16.msra.mxu0 %v1943
    %1965 = vmatpush.bf16.msra.mxu0 %v1942
    %1966 = vmatmul.bf16.gmra.mxu0 %v1887
    %v1967 = vpop.f32.mrf.mxu0
    %v1968 = vadd.f32 %v1908, %v1967
    %v1969 = vpop.f32.mrf.mxu0
    %v1970 = vadd.f32 %v1908, %v1969
    %1971 = vdwg.mxu0
    %v1972 = vadd.f32 %v1745, %v1968
    %v1973 = vadd.f32 %v1746, %v1970
    %v1974 = vld [vmem:[#allocation2] sm:$0x3]
    %v1976 = vsel %vm265, %v1974, 0
    %1978 = vmatpush.msra.mxu0 0.0
    %1979 = vmatpush.msra.mxu0 0.0
    %1980 = vmatpush.msra.mxu0 0.0
    %1981 = vmatpush.msra.mxu0 0.0
    %1982 = vmatpush.msra.mxu0 0.0
    %1983 = vmatpush.msra.mxu0 0.0
    %1984 = vmatpush.msra.mxu0 0.0
    %1985 = vmatpush.msra.mxu0 0.0
    %1986 = vmatpush.msra.mxu0 0.0
    %1987 = vmatpush.msra.mxu0 0.0
    %1988 = vmatpush.msra.mxu0 0.0
    %1989 = vmatpush.msra.mxu0 0.0
    %1990 = vmatpush.msra.mxu0 0.0
    %1991 = vmatpush.msra.mxu0 0.0
    %1992 = vmatpush.msra.mxu0 %v1973
    %1993 = vmatpush.msra.mxu0 %v1972
    %1994 = vmatmul.f32.gmra.mxu0 %v1976
    %v1995 = vpop.f32.mrf.mxu0
    %v1996 = vadd.f32 0.0, %v1995
    %1997 = vdwg.mxu0
    %v1998 = vld [vmem:[%s16] sm:$0x1]
    %v1999 = vld [vmem:[%s17] sm:$0x1]
    %vm2000 = vcmask 254976
    %v2001 = vsel %vm2000, %v1996, 0.0
    %2002 = vadd.xlane.f32.xlu0 %v2001
    %v2003 = vpop.xlane.xlu0 %2002
    %v2004 = vmul.f32 %v2003, %v132
    %v2005 = vsub.f32 %v1996, %v2004
    %v2006 = vmul.f32 %v2005, %v2005
    %v2007 = vsel %vm2000, %v2006, 0.0
    %2008 = vadd.xlane.f32.xlu0 %v2007
    %v2009 = vpop.xlane.xlu0 %2008
    %v2010 = vmul.f32 %v2009, %v132
    %v2011 = vadd.f32 %v2010, 1e-05
    %v2012 = vrsqrt.pop %v2011
    %v2013 = vmul.f32 %v2012, %v2011
    %v2014 = vmul.f32 %v2013, %v2012
    %v2015 = vmul.f32 0.5, %v2014
    %v2016 = vsub.f32 1.5, %v2015
    %v2017 = vmul.f32 %v2012, %v2016
    %vm2018 = vweird.f32 %v2011
    %vm2019 = vweird.f32 %v2012
    %vm2020 = vmor %vm2018, %vm2019
    %v2021 = vsel %vm2020, %v2012, %v2017
    %v2022 = vmul.f32 %v2005, %v2021
    %v2024 = vperm.slane %v1998, 0
    %v2026 = vmul.f32 %v2022, %v2024
    %v2028 = vperm.slane %v1999, 0
    %v2030 = vadd.f32 %v2026, %v2028
    %v2031 = vpack.c.bf16 %v2030, %v2030
    %v2032 = vld [vmem:[%s18] sm:$0xf]
    %v2033 = vld [vmem:[%s18 + $0x4] sm:$0xf]
    %v2034 = vld [vmem:[%s18 + $0x8] sm:$0xf]
    %v2035 = vld [vmem:[%s18 + $0xc] sm:$0xf]
    %v2040 = vunpack.c.l.b16 %v2032
    %v2041 = vunpack.c.l.b16 %v2033
    %v2042 = vunpack.c.l.b16 %v2034
    %v2043 = vunpack.c.l.b16 %v2035
    %v2044 = vpack.c.b16 %v2041, %v2040
    %v2045 = vpack.c.b16 %v2043, %v2042
    %v2049 = vsel %vm119, %v2031, 0
    %2051 = vmatpush.bf16.msra.mxu0 0
    %2052 = vmatpush.bf16.msra.mxu0 0
    %2053 = vmatpush.bf16.msra.mxu0 0
    %2054 = vmatpush.bf16.msra.mxu0 0
    %2055 = vmatpush.bf16.msra.mxu0 0
    %2056 = vmatpush.bf16.msra.mxu0 0
    %2057 = vmatpush.bf16.msra.mxu0 %v2045
    %2058 = vmatpush.bf16.msra.mxu0 %v2044
    %2059 = vmatmul.bf16.gmra.mxu0 %v2049
    %v2060 = vpop.f32.mrf.mxu0
    %v2061 = vadd.f32 0.0, %v2060
    %v2062 = vpop.f32.mrf.mxu0
    %2063 = vdwg.mxu0
    %vm2064 = vcmask 517120
    %2065 = vst.msk [vmem:[#allocation8] sm:$0x3] %vm2064, %v2061
    // Predicated region
    $region90: #{tpu_custom_call.1} parent=1 // pred_check
      _
    $region91: #{tpu_custom_call.1} parent=1 // pred_check_branch
      %2067 = sbr.rel (0) target = $region93
    $region92: #{tpu_custom_call.1} parent=1 // pred_region
      %2069 = vsyncadd [#allocation4], 0
      %s2071 = sshll.u32 [#allocation8], 4
      %s2072 = int_to_ptr.vmem [resolvable:$true] %s2071
      %s2073 = sshll.u32 %s19, 4
      %s2074 = int_to_ptr.hbm [resolvable:$true] %s2073
      %2076 = dma.vmem_to_hbm [thread:$0]  %s2072, 32, %s2074, [#allocation4]
    $region93: #{tpu_custom_call.1} parent=1 // pred_fallthru
      _
    // Predicated region
    $region94: #{tpu_custom_call.1} parent=1 // pred_check
      _
    $region95: #{tpu_custom_call.1} parent=1 // pred_check_branch
      %2078 = sbr.rel (0) target = $region97
    $region96: #{tpu_custom_call.1} parent=1 // pred_region
      %2080 = dma.done [#allocation4], 32
    $region97: #{tpu_custom_call.1} parent=1 // pred_fallthru
      _
    %2081 = vsyncpa [#allocation3], 1
    %2082 = vsyncpa [#allocation6], 1
    %2083 = vsyncpa [#allocation4], 1

</llo_original>
